<compile_context>
chip_gen: v7x
topology: tpu7x:2x2x1
jax: 0.10.0
libtpu: 0.0.40
codegen_flags: <defaults>
</compile_context>

<pallas_src>
import jax
import jax.numpy as jnp
from jax import lax
from jax.experimental import pallas as pl
from jax.experimental.pallas import tpu as pltpu


NEG_SLOPE = 0.01  # torch.nn.LeakyReLU default


def _leaky_relu(v):
    return jnp.where(v >= 0, v, NEG_SLOPE * v)


def discriminator_kernel(x_ref,
                         w1_ref, b1_ref,
                         w2_ref, b2_ref,
                         w3_ref, b3_ref,
                         w4_ref, b4_ref,
                         o_ref):
    # x_ref: (TB, D) bf16 batch tile. Weights/biases are fully VMEM-resident.
    x = x_ref[...]  # bf16, fed straight to the MXU (f32 accumulation)

    h = jnp.dot(x, w1_ref[...], preferred_element_type=jnp.float32) + b1_ref[...]
    h = _leaky_relu(h)
    h = jnp.dot(h, w2_ref[...], preferred_element_type=jnp.float32) + b2_ref[...]
    h = _leaky_relu(h)
    h = jnp.dot(h, w3_ref[...], preferred_element_type=jnp.float32) + b3_ref[...]
    h = _leaky_relu(h)                                            # (TB, 16) f32

    # Final 16 -> 1 layer computed lane-major: contract the 16-dim of
    # w4_pad (8, 16) against the 16-dim of h (TB, 16) -> (8, TB); row 0 is the
    # real output (rows 1..7 of w4_pad are zero).  Gives a lane-dense store.
    rows = lax.dot_general(
        w4_ref[...], h,
        dimension_numbers=(((1,), (1,)), ((), ())),
        preferred_element_type=jnp.float32)                       # (8, TB)
    row = rows[0:1, :] + b4_ref[...]                              # (1, TB)
    o_ref[...] = row.astype(o_ref.dtype)


def discriminator_forward(x, params, *, tile_b=128):
    """x: [B, D] float32. params: w1..w4 stored [in, out], b1..b4 stored [1, out]."""
    assert tile_b % 128 == 0, "tile_b must be a multiple of 128 (lane width)"
    B, D = x.shape

    num_tiles = pl.cdiv(B, tile_b)
    B_pad = num_tiles * tile_b
    if B_pad != B:
        x = jnp.pad(x, ((0, B_pad - B), (0, 0)))

    # Big operands in bf16 (f32 accumulation in-kernel); tiny layers stay f32.
    x_bf = x.astype(jnp.bfloat16)
    w1 = params["w1"].astype(jnp.bfloat16)
    b1 = params["b1"]
    w2, b2 = params["w2"], params["b2"]
    w3, b3 = params["w3"], params["b3"]
    w4_pad = jnp.pad(params["w4"].T, ((0, 7), (0, 0)))   # (1,16) -> (8,16), rows 1..7 zero
    b4 = params["b4"]                                    # (1, 1)

    full = lambda arr: pl.BlockSpec(arr.shape, lambda i: (0, 0))

    out_row = pl.pallas_call(
        discriminator_kernel,
        out_shape=jax.ShapeDtypeStruct((1, B_pad), jnp.float32),
        grid_spec=pltpu.PrefetchScalarGridSpec(
            num_scalar_prefetch=0,
            grid=(num_tiles,),
            in_specs=[
                pl.BlockSpec((tile_b, D), lambda i: (i, 0)),       # x tile
                full(w1), full(b1),
                full(w2), full(b2),
                full(w3), full(b3),
                full(w4_pad), full(b4),
            ],
            out_specs=pl.BlockSpec((1, tile_b), lambda i: (0, i)),  # lane-dense
        ),
        compiler_params=pltpu.CompilerParams(
            dimension_semantics=("parallel",)),
    )(x_bf, w1, b1, w2, b2, w3, b3, w4_pad, b4)

    return out_row.reshape(-1)[:B].reshape(B, 1)


def init_params(key, input_size):
    """Deterministic synthetic parameters matching the module's layer shapes."""
    dims = [(input_size, 64), (64, 32), (32, 16), (16, 1)]
    params = {}
    for idx, (fan_in, fan_out) in enumerate(dims, start=1):
        key, kw, kb = jax.random.split(key, 3)
        bound = 1.0 / jnp.sqrt(fan_in)
        # stored as [in, out] (transpose of PyTorch's [out, in])
        params[f"w{idx}"] = jax.random.uniform(
            kw, (fan_in, fan_out), jnp.float32, -bound, bound)
        params[f"b{idx}"] = jax.random.uniform(
            kb, (1, fan_out), jnp.float32, -bound, bound)
    return params


def reference_forward(x, params):
    """Pure-JAX reference with the same bf16 quantization of x / W1 as the kernel."""
    h = jnp.dot(x.astype(jnp.bfloat16), params["w1"].astype(jnp.bfloat16),
                preferred_element_type=jnp.float32) + params["b1"]
    h = _leaky_relu(h)
    h = jnp.dot(h, params["w2"], preferred_element_type=jnp.float32) + params["b2"]
    h = _leaky_relu(h)
    h = jnp.dot(h, params["w3"], preferred_element_type=jnp.float32) + params["b3"]
    h = _leaky_relu(h)
    return jnp.dot(h, params["w4"], preferred_element_type=jnp.float32) + params["b4"]


if __name__ == "__main__":
    # Small shapes consistent with the module (input_size is a ctor arg).
    B, D = 256, 512
    key = jax.random.PRNGKey(0)
    key, kx = jax.random.split(key)
    x = jax.random.normal(kx, (B, D), jnp.float32)
    params = init_params(key, D)

    out = discriminator_forward(x, params, tile_b=128)
    out = jax.block_until_ready(out)
    ref = reference_forward(x, params)
    assert out.shape == (B, 1)
    err = float(jnp.max(jnp.abs(out - ref)))
    assert jnp.allclose(out, ref, atol=1e-2, rtol=1e-2), f"mismatch vs reference (max abs err {err})"

    # Also exercise the padded-batch path (B not a multiple of tile_b).
    B2 = 200
    x2 = x[:B2]
    out2 = jax.block_until_ready(discriminator_forward(x2, params, tile_b=128))
    ref2 = reference_forward(x2, params)
    assert out2.shape == (B2, 1)
    err2 = float(jnp.max(jnp.abs(out2 - ref2)))
    assert jnp.allclose(out2, ref2, atol=1e-2, rtol=1e-2), f"padded-path mismatch (max abs err {err2})"

    print("KERNEL_OK")
</pallas_src>

<mosaic_0001>
module attributes {stable_mosaic.version = 11 : i64} {
  func.func @discriminator_kernel(%arg0: i32, %arg1: memref<128x512xbf16, #tpu.memory_space<vmem>>, %arg2: memref<512x64xbf16, #tpu.memory_space<vmem>>, %arg3: memref<1x64xf32, #tpu.memory_space<vmem>>, %arg4: memref<64x32xf32, #tpu.memory_space<vmem>>, %arg5: memref<1x32xf32, #tpu.memory_space<vmem>>, %arg6: memref<32x16xf32, #tpu.memory_space<vmem>>, %arg7: memref<1x16xf32, #tpu.memory_space<vmem>>, %arg8: memref<8x16xf32, #tpu.memory_space<vmem>>, %arg9: memref<1x1xf32, #tpu.memory_space<vmem>>, %arg10: memref<1x128xf32, #tpu.memory_space<vmem>>) attributes {dimension_semantics = [#tpu.dimension_semantics<parallel>], iteration_bounds = array<i64: 2>, scalar_prefetch = 0 : i64, scratch_operands = 0 : i64, tpu.core_type = #tpu.core_type<tc>, window_params = [{transform_indices = @transform_0, window_bounds = array<i64: 128, 512>}, {pipeline_mode = #tpu.pipeline_mode<synchronous>, transform_indices = @transform_1, window_bounds = array<i64: 512, 64>}, {pipeline_mode = #tpu.pipeline_mode<synchronous>, transform_indices = @transform_2, window_bounds = array<i64: 1, 64>}, {pipeline_mode = #tpu.pipeline_mode<synchronous>, transform_indices = @transform_3, window_bounds = array<i64: 64, 32>}, {pipeline_mode = #tpu.pipeline_mode<synchronous>, transform_indices = @transform_4, window_bounds = array<i64: 1, 32>}, {pipeline_mode = #tpu.pipeline_mode<synchronous>, transform_indices = @transform_5, window_bounds = array<i64: 32, 16>}, {pipeline_mode = #tpu.pipeline_mode<synchronous>, transform_indices = @transform_6, window_bounds = array<i64: 1, 16>}, {pipeline_mode = #tpu.pipeline_mode<synchronous>, transform_indices = @transform_7, window_bounds = array<i64: 8, 16>}, {pipeline_mode = #tpu.pipeline_mode<synchronous>, transform_indices = @transform_8, window_bounds = array<i64: 1, 1>}, {transform_indices = @transform_9, window_bounds = array<i64: 1, 128>}]} {
    %c0 = arith.constant 0 : index
    %c0_0 = arith.constant 0 : index
    %0 = vector.load %arg1[%c0, %c0_0] : memref<128x512xbf16, #tpu.memory_space<vmem>>, vector<128x512xbf16>
    %c0_1 = arith.constant 0 : index
    %c0_2 = arith.constant 0 : index
    %1 = vector.load %arg2[%c0_1, %c0_2] : memref<512x64xbf16, #tpu.memory_space<vmem>>, vector<512x64xbf16>
    %cst = arith.constant dense<0.000000e+00> : vector<128x64xf32>
    %2 = tpu.matmul %0, %1, %cst {dimension_numbers = #tpu.dot_dimension_numbers<[1], [0], [0], [1], [0, 0, 1, 1], [], []>} : vector<128x512xbf16>, vector<512x64xbf16>, vector<128x64xf32> -> vector<128x64xf32>
    %c0_3 = arith.constant 0 : index
    %c0_4 = arith.constant 0 : index
    %3 = vector.load %arg3[%c0_3, %c0_4] : memref<1x64xf32, #tpu.memory_space<vmem>>, vector<1x64xf32>
    %4 = vector.broadcast %3 : vector<1x64xf32> to vector<128x64xf32>
    %5 = arith.addf %2, %4 : vector<128x64xf32>
    %cst_5 = arith.constant 0.000000e+00 : f32
    %6 = vector.broadcast %cst_5 : f32 to vector<128x64xf32>
    %7 = arith.cmpf oge, %5, %6 : vector<128x64xf32>
    %cst_6 = arith.constant 0.00999999977 : f32
    %8 = vector.broadcast %cst_6 : f32 to vector<128x64xf32>
    %9 = arith.mulf %8, %5 : vector<128x64xf32>
    %10 = arith.select %7, %5, %9 : vector<128x64xi1>, vector<128x64xf32>
    %c0_7 = arith.constant 0 : index
    %c0_8 = arith.constant 0 : index
    %11 = vector.load %arg4[%c0_7, %c0_8] : memref<64x32xf32, #tpu.memory_space<vmem>>, vector<64x32xf32>
    %cst_9 = arith.constant dense<0.000000e+00> : vector<128x32xf32>
    %12 = tpu.matmul %10, %11, %cst_9 {dimension_numbers = #tpu.dot_dimension_numbers<[1], [0], [0], [1], [0, 0, 1, 1], [], []>} : vector<128x64xf32>, vector<64x32xf32>, vector<128x32xf32> -> vector<128x32xf32>
    %c0_10 = arith.constant 0 : index
    %c0_11 = arith.constant 0 : index
    %13 = vector.load %arg5[%c0_10, %c0_11] : memref<1x32xf32, #tpu.memory_space<vmem>>, vector<1x32xf32>
    %14 = vector.broadcast %13 : vector<1x32xf32> to vector<128x32xf32>
    %15 = arith.addf %12, %14 : vector<128x32xf32>
    %cst_12 = arith.constant 0.000000e+00 : f32
    %16 = vector.broadcast %cst_12 : f32 to vector<128x32xf32>
    %17 = arith.cmpf oge, %15, %16 : vector<128x32xf32>
    %cst_13 = arith.constant 0.00999999977 : f32
    %18 = vector.broadcast %cst_13 : f32 to vector<128x32xf32>
    %19 = arith.mulf %18, %15 : vector<128x32xf32>
    %20 = arith.select %17, %15, %19 : vector<128x32xi1>, vector<128x32xf32>
    %c0_14 = arith.constant 0 : index
    %c0_15 = arith.constant 0 : index
    %21 = vector.load %arg6[%c0_14, %c0_15] : memref<32x16xf32, #tpu.memory_space<vmem>>, vector<32x16xf32>
    %cst_16 = arith.constant dense<0.000000e+00> : vector<128x16xf32>
    %22 = tpu.matmul %20, %21, %cst_16 {dimension_numbers = #tpu.dot_dimension_numbers<[1], [0], [0], [1], [0, 0, 1, 1], [], []>} : vector<128x32xf32>, vector<32x16xf32>, vector<128x16xf32> -> vector<128x16xf32>
    %c0_17 = arith.constant 0 : index
    %c0_18 = arith.constant 0 : index
    %23 = vector.load %arg7[%c0_17, %c0_18] : memref<1x16xf32, #tpu.memory_space<vmem>>, vector<1x16xf32>
    %24 = vector.broadcast %23 : vector<1x16xf32> to vector<128x16xf32>
    %25 = arith.addf %22, %24 : vector<128x16xf32>
    %cst_19 = arith.constant 0.000000e+00 : f32
    %26 = vector.broadcast %cst_19 : f32 to vector<128x16xf32>
    %27 = arith.cmpf oge, %25, %26 : vector<128x16xf32>
    %cst_20 = arith.constant 0.00999999977 : f32
    %28 = vector.broadcast %cst_20 : f32 to vector<128x16xf32>
    %29 = arith.mulf %28, %25 : vector<128x16xf32>
    %30 = arith.select %27, %25, %29 : vector<128x16xi1>, vector<128x16xf32>
    %c0_21 = arith.constant 0 : index
    %c0_22 = arith.constant 0 : index
    %31 = vector.load %arg8[%c0_21, %c0_22] : memref<8x16xf32, #tpu.memory_space<vmem>>, vector<8x16xf32>
    %cst_23 = arith.constant dense<0.000000e+00> : vector<8x128xf32>
    %32 = tpu.matmul %31, %30, %cst_23 {dimension_numbers = #tpu.dot_dimension_numbers<[1], [1], [0], [0], [0, 0, 1, 0], [], []>} : vector<8x16xf32>, vector<128x16xf32>, vector<8x128xf32> -> vector<8x128xf32>
    %33 = vector.extract_strided_slice %32 {offsets = [0, 0], sizes = [1, 128], strides = [1, 1]} : vector<8x128xf32> to vector<1x128xf32>
    %c0_24 = arith.constant 0 : index
    %c0_25 = arith.constant 0 : index
    %34 = vector.load %arg9[%c0_24, %c0_25] : memref<1x1xf32, #tpu.memory_space<vmem>>, vector<1x1xf32>
    %35 = vector.broadcast %34 : vector<1x1xf32> to vector<1x128xf32>
    %36 = arith.addf %33, %35 : vector<1x128xf32>
    %c0_26 = arith.constant 0 : index
    %c0_27 = arith.constant 0 : index
    %37 = vector.load %arg10[%c0_26, %c0_27] : memref<1x128xf32, #tpu.memory_space<vmem>>, vector<1x128xf32>
    tpu.vector_store %arg10[%c0_26, %c0_27], %36 {strides = array<i32>} : memref<1x128xf32, #tpu.memory_space<vmem>>, vector<1x128xf32>,
    return
  }
  func.func @transform_0(%arg0: i32) -> (i32, i32) {
    %c0_i32 = arith.constant 0 : i32
    %c0_i32_0 = arith.constant 0 : i32
    return %arg0, %c0_i32 : i32, i32
  }
  func.func @transform_1(%arg0: i32) -> (i32, i32) {
    %c0_i32 = arith.constant 0 : i32
    %c0_i32_0 = arith.constant 0 : i32
    %c0_i32_1 = arith.constant 0 : i32
    return %c0_i32, %c0_i32_0 : i32, i32
  }
  func.func @transform_2(%arg0: i32) -> (i32, i32) {
    %c0_i32 = arith.constant 0 : i32
    %c0_i32_0 = arith.constant 0 : i32
    %c0_i32_1 = arith.constant 0 : i32
    return %c0_i32, %c0_i32_0 : i32, i32
  }
  func.func @transform_3(%arg0: i32) -> (i32, i32) {
    %c0_i32 = arith.constant 0 : i32
    %c0_i32_0 = arith.constant 0 : i32
    %c0_i32_1 = arith.constant 0 : i32
    return %c0_i32, %c0_i32_0 : i32, i32
  }
  func.func @transform_4(%arg0: i32) -> (i32, i32) {
    %c0_i32 = arith.constant 0 : i32
    %c0_i32_0 = arith.constant 0 : i32
    %c0_i32_1 = arith.constant 0 : i32
    return %c0_i32, %c0_i32_0 : i32, i32
  }
  func.func @transform_5(%arg0: i32) -> (i32, i32) {
    %c0_i32 = arith.constant 0 : i32
    %c0_i32_0 = arith.constant 0 : i32
    %c0_i32_1 = arith.constant 0 : i32
    return %c0_i32, %c0_i32_0 : i32, i32
  }
  func.func @transform_6(%arg0: i32) -> (i32, i32) {
    %c0_i32 = arith.constant 0 : i32
    %c0_i32_0 = arith.constant 0 : i32
    %c0_i32_1 = arith.constant 0 : i32
    return %c0_i32, %c0_i32_0 : i32, i32
  }
  func.func @transform_7(%arg0: i32) -> (i32, i32) {
    %c0_i32 = arith.constant 0 : i32
    %c0_i32_0 = arith.constant 0 : i32
    %c0_i32_1 = arith.constant 0 : i32
    return %c0_i32, %c0_i32_0 : i32, i32
  }
  func.func @transform_8(%arg0: i32) -> (i32, i32) {
    %c0_i32 = arith.constant 0 : i32
    %c0_i32_0 = arith.constant 0 : i32
    %c0_i32_1 = arith.constant 0 : i32
    return %c0_i32, %c0_i32_0 : i32, i32
  }
  func.func @transform_9(%arg0: i32) -> (i32, i32) {
    %c0_i32 = arith.constant 0 : i32
    %c0_i32_0 = arith.constant 0 : i32
    return %c0_i32, %arg0 : i32, i32
  }
}

</mosaic_0001>

<llo_original>
// kernel: tpu_custom_call.1
$region0: #{tpu_custom_call.1}
  #allocation0 [shape = 'u32[]', space=smem, size = 0x4, offset = 0x4, fixed_abs, tag = 'smem constant byte address 0x4 - core index']
  #allocation1 [shape = 'u32[144,128]{1,0:T(1,128)}', space=vmem, size = 0x12000, scoped, tag = 'internal scratch']
  #allocation2 [shape = 'f32[1,1]{1,0:T(1,128)S(1)}', space=vmem, size = 0x200, scoped, tag = 'scoped memory for tpu_custom_call.1']
  %s0 = inlined_call_operand.vmem [shape: bf16[256,512], index: 0, kind: input, shape index: {}]
  %s1 = inlined_call_operand.vmem [shape: bf16[512,64], index: 1, kind: input, shape index: {}]
  %s2 = inlined_call_operand.vmem [shape: f32[1,64], index: 2, kind: input, shape index: {}]
  %s3 = inlined_call_operand.vmem [shape: f32[64,32], index: 3, kind: input, shape index: {}]
  %s4 = inlined_call_operand.vmem [shape: f32[1,32], index: 4, kind: input, shape index: {}]
  %s5 = inlined_call_operand.vmem [shape: f32[32,16], index: 5, kind: input, shape index: {}]
  %s6 = inlined_call_operand.vmem [shape: f32[1,16], index: 6, kind: input, shape index: {}]
  %s7 = inlined_call_operand.vmem [shape: f32[8,16], index: 7, kind: input, shape index: {}]
  %s8 = inlined_call_operand.<no memory space> [shape: f32[1,1], index: 8, kind: input, shape index: {}]
  %s9 = inlined_call_operand.hbm [shape: f32[1,256], index: 9, kind: output, shape index: {}]
  %s10 = sld [smem:[#allocation0]]
  $region69: #{tpu_custom_call.1} parent=0
    _
  %s12 = ssub.s32 1, %s10
  %s13 = scalar_select 0, %s12, %s10
  %v14 = vstv %s8
  %15 = vst [vmem:[#allocation2] sm:$0x1] %v14
  $region1: #{tpu_custom_call.1} parent=0
    #allocation3 [shape = 'u8[1024]{0}', space=vmem, size = 0x400, scoped, tag = 'output window, operand 0']
    #allocation4 [shape = 's32[2]{0}', space=sflag, size = 0x8, scoped, tag = 'scoped memory for tpu_custom_call.1']
    %16 = vsyncpa [#allocation4], 0
    %s17 = scalar_lea.sflag [#allocation4], 1
    %18 = vsyncpa %s17, 0
    loop: start=0, step=1, limit=4
    $region2: #{tpu_custom_call.1} parent=1 // loop_pre_header
      _
    $region3: #{tpu_custom_call.1} parent=1 // loop_header
      %s20 = sphi 0, %s24
      %p21 = scmp.ge.s32.totalorder %s20, 4
      %s30 = sphi 0, %s32
      %s33 = sphi 0, %s30
      %s34 = sphi 0, %s33
      %s50 = sphi 0, %s34
      %s54 = sphi 0, %s54
      %s56 = sphi 0, %s54
      %s57 = sphi 0, %s56
      %s71 = sphi 0, %s57
      %s75 = sphi 0, %s75
      %s77 = sphi 0, %s75
      %s78 = sphi 0, %s77
      %s92 = sphi 0, %s78
      %s96 = sphi 0, %s96
      %s98 = sphi 0, %s96
      %s99 = sphi 0, %s98
      %s113 = sphi 0, %s99
      %s117 = sphi 0, %s117
      %s119 = sphi 0, %s117
      %s120 = sphi 0, %s119
      %s134 = sphi 0, %s120
      %s138 = sphi 0, %s138
      %s140 = sphi 0, %s138
      %s141 = sphi 0, %s140
      %s155 = sphi 0, %s141
      %s159 = sphi 0, %s159
      %s161 = sphi 0, %s159
      %s162 = sphi 0, %s161
      %s176 = sphi 0, %s162
      %s180 = sphi 0, %s180
      %s182 = sphi 0, %s180
      %s183 = sphi 0, %s182
      %s197 = sphi 0, %s183
      %s201 = sphi 0, %s201
      %s203 = sphi 0, %s201
      %s204 = sphi 0, %s203
      %s218 = sphi 0, %s204
      %s224 = sphi 0, %s226
      %s227 = sphi 0, %s224
      %s228 = sphi 0, %s227
      %s244 = sphi 0, %s228
    $region4: #{tpu_custom_call.1} parent=1 // loop_header_branch
      %23 = sbr.rel (%p21) target = $region8
    $region5: #{tpu_custom_call.1} parent=1 // loop_body
      %s25 = ssub.s32 %s20, 1
      %s26 = ssub.s32 %s20, 2
      %s27 = sadd.s32 %s20, 1
      %s28 = ssub.s32 %s20, %s27
      %p29 = scmp.eq.s32.totalorder %s28, 0
      %s31 = sadd.s32 %s30, 1
      %s32 = scalar_select %p29, %s30, %s31
      %p35 = pneg %p29
      %p36 = scmp.eq.s32.totalorder %s20, 1
      %p37 = por %p35, %p36
      %p38 = scmp.ne.s32.totalorder %s30, %s33
      %p39 = scmp.eq.s32.totalorder %s20, 0
      %p40 = por %p38, %p39
      %p41 = scmp.ne.s32.totalorder %s30, %s33
      %p42 = scmp.eq.s32.totalorder %s25, 1
      %p43 = por %p41, %p42
      %p44 = scmp.ne.s32.totalorder %s33, %s34
      %p45 = scmp.eq.s32.totalorder %s25, 0
      %p46 = por %p44, %p45
      %p47 = scmp.ne.s32.totalorder %s33, %s34
      %p48 = scmp.eq.s32.totalorder %s26, 1
      %p49 = por %p47, %p48
      %p51 = scmp.ne.s32.totalorder %s34, %s50
      %p52 = scmp.eq.s32.totalorder %s26, 0
      %p53 = por %p51, %p52
      %s55 = sadd.s32 %s54, 1
      %p58 = scmp.eq.s32.totalorder %s20, 1
      %p59 = scmp.ne.s32.totalorder %s54, %s56
      %p60 = scmp.eq.s32.totalorder %s20, 0
      %p61 = por %p59, %p60
      %p62 = scmp.ne.s32.totalorder %s54, %s56
      %p63 = scmp.eq.s32.totalorder %s25, 1
      %p64 = por %p62, %p63
      %p65 = scmp.ne.s32.totalorder %s56, %s57
      %p66 = scmp.eq.s32.totalorder %s25, 0
      %p67 = por %p65, %p66
      %p68 = scmp.ne.s32.totalorder %s56, %s57
      %p69 = scmp.eq.s32.totalorder %s26, 1
      %p70 = por %p68, %p69
      %p72 = scmp.ne.s32.totalorder %s57, %s71
      %p73 = scmp.eq.s32.totalorder %s26, 0
      %p74 = por %p72, %p73
      %s76 = sadd.s32 %s75, 1
      %p79 = scmp.eq.s32.totalorder %s20, 1
      %p80 = scmp.ne.s32.totalorder %s75, %s77
      %p81 = scmp.eq.s32.totalorder %s20, 0
      %p82 = por %p80, %p81
      %p83 = scmp.ne.s32.totalorder %s75, %s77
      %p84 = scmp.eq.s32.totalorder %s25, 1
      %p85 = por %p83, %p84
      %p86 = scmp.ne.s32.totalorder %s77, %s78
      %p87 = scmp.eq.s32.totalorder %s25, 0
      %p88 = por %p86, %p87
      %p89 = scmp.ne.s32.totalorder %s77, %s78
      %p90 = scmp.eq.s32.totalorder %s26, 1
      %p91 = por %p89, %p90
      %p93 = scmp.ne.s32.totalorder %s78, %s92
      %p94 = scmp.eq.s32.totalorder %s26, 0
      %p95 = por %p93, %p94
      %s97 = sadd.s32 %s96, 1
      %p100 = scmp.eq.s32.totalorder %s20, 1
      %p101 = scmp.ne.s32.totalorder %s96, %s98
      %p102 = scmp.eq.s32.totalorder %s20, 0
      %p103 = por %p101, %p102
      %p104 = scmp.ne.s32.totalorder %s96, %s98
      %p105 = scmp.eq.s32.totalorder %s25, 1
      %p106 = por %p104, %p105
      %p107 = scmp.ne.s32.totalorder %s98, %s99
      %p108 = scmp.eq.s32.totalorder %s25, 0
      %p109 = por %p107, %p108
      %p110 = scmp.ne.s32.totalorder %s98, %s99
      %p111 = scmp.eq.s32.totalorder %s26, 1
      %p112 = por %p110, %p111
      %p114 = scmp.ne.s32.totalorder %s99, %s113
      %p115 = scmp.eq.s32.totalorder %s26, 0
      %p116 = por %p114, %p115
      %s118 = sadd.s32 %s117, 1
      %p121 = scmp.eq.s32.totalorder %s20, 1
      %p122 = scmp.ne.s32.totalorder %s117, %s119
      %p123 = scmp.eq.s32.totalorder %s20, 0
      %p124 = por %p122, %p123
      %p125 = scmp.ne.s32.totalorder %s117, %s119
      %p126 = scmp.eq.s32.totalorder %s25, 1
      %p127 = por %p125, %p126
      %p128 = scmp.ne.s32.totalorder %s119, %s120
      %p129 = scmp.eq.s32.totalorder %s25, 0
      %p130 = por %p128, %p129
      %p131 = scmp.ne.s32.totalorder %s119, %s120
      %p132 = scmp.eq.s32.totalorder %s26, 1
      %p133 = por %p131, %p132
      %p135 = scmp.ne.s32.totalorder %s120, %s134
      %p136 = scmp.eq.s32.totalorder %s26, 0
      %p137 = por %p135, %p136
      %s139 = sadd.s32 %s138, 1
      %p142 = scmp.eq.s32.totalorder %s20, 1
      %p143 = scmp.ne.s32.totalorder %s138, %s140
      %p144 = scmp.eq.s32.totalorder %s20, 0
      %p145 = por %p143, %p144
      %p146 = scmp.ne.s32.totalorder %s138, %s140
      %p147 = scmp.eq.s32.totalorder %s25, 1
      %p148 = por %p146, %p147
      %p149 = scmp.ne.s32.totalorder %s140, %s141
      %p150 = scmp.eq.s32.totalorder %s25, 0
      %p151 = por %p149, %p150
      %p152 = scmp.ne.s32.totalorder %s140, %s141
      %p153 = scmp.eq.s32.totalorder %s26, 1
      %p154 = por %p152, %p153
      %p156 = scmp.ne.s32.totalorder %s141, %s155
      %p157 = scmp.eq.s32.totalorder %s26, 0
      %p158 = por %p156, %p157
      %s160 = sadd.s32 %s159, 1
      %p163 = scmp.eq.s32.totalorder %s20, 1
      %p164 = scmp.ne.s32.totalorder %s159, %s161
      %p165 = scmp.eq.s32.totalorder %s20, 0
      %p166 = por %p164, %p165
      %p167 = scmp.ne.s32.totalorder %s159, %s161
      %p168 = scmp.eq.s32.totalorder %s25, 1
      %p169 = por %p167, %p168
      %p170 = scmp.ne.s32.totalorder %s161, %s162
      %p171 = scmp.eq.s32.totalorder %s25, 0
      %p172 = por %p170, %p171
      %p173 = scmp.ne.s32.totalorder %s161, %s162
      %p174 = scmp.eq.s32.totalorder %s26, 1
      %p175 = por %p173, %p174
      %p177 = scmp.ne.s32.totalorder %s162, %s176
      %p178 = scmp.eq.s32.totalorder %s26, 0
      %p179 = por %p177, %p178
      %s181 = sadd.s32 %s180, 1
      %p184 = scmp.eq.s32.totalorder %s20, 1
      %p185 = scmp.ne.s32.totalorder %s180, %s182
      %p186 = scmp.eq.s32.totalorder %s20, 0
      %p187 = por %p185, %p186
      %p188 = scmp.ne.s32.totalorder %s180, %s182
      %p189 = scmp.eq.s32.totalorder %s25, 1
      %p190 = por %p188, %p189
      %p191 = scmp.ne.s32.totalorder %s182, %s183
      %p192 = scmp.eq.s32.totalorder %s25, 0
      %p193 = por %p191, %p192
      %p194 = scmp.ne.s32.totalorder %s182, %s183
      %p195 = scmp.eq.s32.totalorder %s26, 1
      %p196 = por %p194, %p195
      %p198 = scmp.ne.s32.totalorder %s183, %s197
      %p199 = scmp.eq.s32.totalorder %s26, 0
      %p200 = por %p198, %p199
      %s202 = sadd.s32 %s201, 1
      %p205 = scmp.eq.s32.totalorder %s20, 1
      %p206 = scmp.ne.s32.totalorder %s201, %s203
      %p207 = scmp.eq.s32.totalorder %s20, 0
      %p208 = por %p206, %p207
      %p209 = scmp.ne.s32.totalorder %s201, %s203
      %p210 = scmp.eq.s32.totalorder %s25, 1
      %p211 = por %p209, %p210
      %p212 = scmp.ne.s32.totalorder %s203, %s204
      %p213 = scmp.eq.s32.totalorder %s25, 0
      %p214 = por %p212, %p213
      %p215 = scmp.ne.s32.totalorder %s203, %s204
      %p216 = scmp.eq.s32.totalorder %s26, 1
      %p217 = por %p215, %p216
      %p219 = scmp.ne.s32.totalorder %s204, %s218
      %p220 = scmp.eq.s32.totalorder %s26, 0
      %p221 = por %p219, %p220
      %s222 = ssub.s32 %s20, %s27
      %p223 = scmp.eq.s32.totalorder %s222, 0
      %s225 = sadd.s32 %s224, 1
      %s226 = scalar_select %p223, %s224, %s225
      %p229 = pneg %p223
      %p230 = scmp.eq.s32.totalorder %s20, 1
      %p231 = por %p229, %p230
      %p232 = scmp.ne.s32.totalorder %s224, %s227
      %p233 = scmp.eq.s32.totalorder %s20, 0
      %p234 = por %p232, %p233
      %p235 = scmp.ne.s32.totalorder %s224, %s227
      %p236 = scmp.eq.s32.totalorder %s25, 1
      %p237 = por %p235, %p236
      %p238 = scmp.ne.s32.totalorder %s227, %s228
      %p239 = scmp.eq.s32.totalorder %s25, 0
      %p240 = por %p238, %p239
      %p241 = scmp.ne.s32.totalorder %s227, %s228
      %p242 = scmp.eq.s32.totalorder %s26, 1
      %p243 = por %p241, %p242
      %p245 = scmp.ne.s32.totalorder %s228, %s244
      %p246 = scmp.eq.s32.totalorder %s26, 0
      %p247 = por %p245, %p246
      %p248 = scmp.le.s32.totalorder 1, %s20
      %p249 = scmp.lt.s32.totalorder %s20, 3
      %p250 = pnand %p248, %p249
      %p251 = pneg %p250
      // Predicated region
      $region9: #{tpu_custom_call.1} parent=5 // pred_check
        _
      $region10: #{tpu_custom_call.1} parent=5 // pred_check_branch
        %253 = sbr.rel (%p250) target = $region12
      $region11: #{tpu_custom_call.1} parent=5 // pred_region
        %s254 = ssub.s32 %s20, 1
        // Predicated region
        $region13: #{tpu_custom_call.1} parent=11 // pred_check
          %p255 = pneg %p67
        $region14: #{tpu_custom_call.1} parent=11 // pred_check_branch
          %257 = sbr.rel (%p255) target = $region16
        $region15: #{tpu_custom_call.1} parent=11 // pred_region
          _
        $region16: #{tpu_custom_call.1} parent=11 // pred_fallthru
          _
        // Predicated region
        $region17: #{tpu_custom_call.1} parent=11 // pred_check
          %p258 = pneg %p88
        $region18: #{tpu_custom_call.1} parent=11 // pred_check_branch
          %260 = sbr.rel (%p258) target = $region20
        $region19: #{tpu_custom_call.1} parent=11 // pred_region
          _
        $region20: #{tpu_custom_call.1} parent=11 // pred_fallthru
          _
        // Predicated region
        $region21: #{tpu_custom_call.1} parent=11 // pred_check
          %p261 = pneg %p109
        $region22: #{tpu_custom_call.1} parent=11 // pred_check_branch
          %263 = sbr.rel (%p261) target = $region24
        $region23: #{tpu_custom_call.1} parent=11 // pred_region
          _
        $region24: #{tpu_custom_call.1} parent=11 // pred_fallthru
          _
        // Predicated region
        $region25: #{tpu_custom_call.1} parent=11 // pred_check
          %p264 = pneg %p130
        $region26: #{tpu_custom_call.1} parent=11 // pred_check_branch
          %266 = sbr.rel (%p264) target = $region28
        $region27: #{tpu_custom_call.1} parent=11 // pred_region
          _
        $region28: #{tpu_custom_call.1} parent=11 // pred_fallthru
          _
        // Predicated region
        $region29: #{tpu_custom_call.1} parent=11 // pred_check
          %p267 = pneg %p151
        $region30: #{tpu_custom_call.1} parent=11 // pred_check_branch
          %269 = sbr.rel (%p267) target = $region32
        $region31: #{tpu_custom_call.1} parent=11 // pred_region
          _
        $region32: #{tpu_custom_call.1} parent=11 // pred_fallthru
          _
        // Predicated region
        $region33: #{tpu_custom_call.1} parent=11 // pred_check
          %p270 = pneg %p172
        $region34: #{tpu_custom_call.1} parent=11 // pred_check_branch
          %272 = sbr.rel (%p270) target = $region36
        $region35: #{tpu_custom_call.1} parent=11 // pred_region
          _
        $region36: #{tpu_custom_call.1} parent=11 // pred_fallthru
          _
        // Predicated region
        $region37: #{tpu_custom_call.1} parent=11 // pred_check
          %p273 = pneg %p193
        $region38: #{tpu_custom_call.1} parent=11 // pred_check_branch
          %275 = sbr.rel (%p273) target = $region40
        $region39: #{tpu_custom_call.1} parent=11 // pred_region
          _
        $region40: #{tpu_custom_call.1} parent=11 // pred_fallthru
          _
        // Predicated region
        $region41: #{tpu_custom_call.1} parent=11 // pred_check
          %p276 = pneg %p214
        $region42: #{tpu_custom_call.1} parent=11 // pred_check_branch
          %278 = sbr.rel (%p276) target = $region44
        $region43: #{tpu_custom_call.1} parent=11 // pred_region
          _
        $region44: #{tpu_custom_call.1} parent=11 // pred_fallthru
          _
      $region12: #{tpu_custom_call.1} parent=5 // pred_fallthru
        _
      %p279 = scmp.lt.s32.totalorder %s20, 2
      // Predicated region
      $region45: #{tpu_custom_call.1} parent=5 // pred_check
        %p280 = pneg %p279
      $region46: #{tpu_custom_call.1} parent=5 // pred_check_branch
        %282 = sbr.rel (%p280) target = $region48
      $region47: #{tpu_custom_call.1} parent=5 // pred_region
        // Predicated region
        $region49: #{tpu_custom_call.1} parent=47 // pred_check
          %p283 = pneg %p40
        $region50: #{tpu_custom_call.1} parent=47 // pred_check_branch
          %285 = sbr.rel (%p283) target = $region52
        $region51: #{tpu_custom_call.1} parent=47 // pred_region
          %s286 = smul.u32 16, %s20
          %p287 = scmp.lt.s32.totalorder %s286, 31
          %s288 = scalar_select %p287, %s286, 31
          %s289 = smul.addr %s288, 4
          %s290 = smul.addr %s289, 4
          %s291 = scalar_lea.vmem %s0, %s290
          %s292 = smul.u32 16, %s20
        $region52: #{tpu_custom_call.1} parent=47 // pred_fallthru
          _
      $region48: #{tpu_custom_call.1} parent=5 // pred_fallthru
        _
      %p293 = scmp.le.s32.totalorder 1, %s20
      %p294 = scmp.lt.s32.totalorder %s20, 3
      %p295 = pnand %p293, %p294
      %p296 = pneg %p295
      // Predicated region
      $region53: #{tpu_custom_call.1} parent=5 // pred_check
        _
      $region54: #{tpu_custom_call.1} parent=5 // pred_check_branch
        %298 = sbr.rel (%p295) target = $region56
      $region55: #{tpu_custom_call.1} parent=5 // pred_region
        %s299 = ssub.s32 %s20, 1
        %s300 = smul.u32 16, %s25
        %p301 = scmp.lt.s32.totalorder %s300, 31
        %s302 = scalar_select %p301, %s300, 31
        %s303 = smul.addr %s302, 4
        %s304 = smul.addr %s303, 4
        %s305 = scalar_lea.vmem %s0, %s304
        %p306 = pneg %p46
        %p307 = pneg %p43
        %p308 = pneg %p67
        %p309 = pneg %p64
        %p310 = pneg %p88
        %p311 = pneg %p85
        %p312 = pneg %p109
        %p313 = pneg %p106
        %p314 = pneg %p130
        %p315 = pneg %p127
        %p316 = pneg %p151
        %p317 = pneg %p148
        %p318 = pneg %p172
        %p319 = pneg %p169
        %p320 = pneg %p193
        %p321 = pneg %p190
        %p322 = pneg %p214
        %p323 = pneg %p211
        %p324 = pneg %p240
        %p325 = pneg %p237
        %s326 = sand.u32 %s227, 1
        %s327 = scalar_lea.sflag [#allocation4], %s326
        %s328 = sand.u32 %s227, 1
        %s329 = scalar_lea.vmem [#allocation3], %s328
        %s330 = smul.u32 16, %s25
        %p331 = scmp.lt.s32.totalorder %s330, 31
        %s332 = scalar_select %p331, %s330, 31
        %s333 = smul.addr %s332, 4
        %s334 = smul.addr %s333, 4
        %s335 = scalar_lea.vmem %s0, %s334
        %s336 = smul.u32 16, %s25
        %v338 = vld [vmem:[%s335] sm:$0xff]
        %v339 = vld [vmem:[%s335 + $0x8] sm:$0xff]
        %v340 = vld [vmem:[%s335 + $0x10] sm:$0xff]
        %v341 = vld [vmem:[%s335 + $0x18] sm:$0xff]
        %v342 = vld [vmem:[%s335 + $0x20] sm:$0xff]
        %v343 = vld [vmem:[%s335 + $0x28] sm:$0xff]
        %v344 = vld [vmem:[%s335 + $0x30] sm:$0xff]
        %v345 = vld [vmem:[%s335 + $0x38] sm:$0xff]
        %v346 = vld [vmem:[%s335 + $0x40] sm:$0xff]
        %v347 = vld [vmem:[%s335 + $0x48] sm:$0xff]
        %v348 = vld [vmem:[%s335 + $0x50] sm:$0xff]
        %v349 = vld [vmem:[%s335 + $0x58] sm:$0xff]
        %v350 = vld [vmem:[%s335 + $0x60] sm:$0xff]
        %v351 = vld [vmem:[%s335 + $0x68] sm:$0xff]
        %v352 = vld [vmem:[%s335 + $0x70] sm:$0xff]
        %v353 = vld [vmem:[%s335 + $0x78] sm:$0xff]
        %v354 = vld [vmem:[%s335 + $0x80] sm:$0xff]
        %v355 = vld [vmem:[%s335 + $0x88] sm:$0xff]
        %v356 = vld [vmem:[%s335 + $0x90] sm:$0xff]
        %v357 = vld [vmem:[%s335 + $0x98] sm:$0xff]
        %v358 = vld [vmem:[%s335 + $0xa0] sm:$0xff]
        %v359 = vld [vmem:[%s335 + $0xa8] sm:$0xff]
        %v360 = vld [vmem:[%s335 + $0xb0] sm:$0xff]
        %v361 = vld [vmem:[%s335 + $0xb8] sm:$0xff]
        %v362 = vld [vmem:[%s335 + $0xc0] sm:$0xff]
        %v363 = vld [vmem:[%s335 + $0xc8] sm:$0xff]
        %v364 = vld [vmem:[%s335 + $0xd0] sm:$0xff]
        %v365 = vld [vmem:[%s335 + $0xd8] sm:$0xff]
        %v366 = vld [vmem:[%s335 + $0xe0] sm:$0xff]
        %v367 = vld [vmem:[%s335 + $0xe8] sm:$0xff]
        %v368 = vld [vmem:[%s335 + $0xf0] sm:$0xff]
        %v369 = vld [vmem:[%s335 + $0xf8] sm:$0xff]
        %v370 = vld [vmem:[%s1] sm:$0xf]
        %v371 = vld [vmem:[%s1 + $0x4] sm:$0xf]
        %v372 = vld [vmem:[%s1 + $0x8] sm:$0xf]
        %v373 = vld [vmem:[%s1 + $0xc] sm:$0xf]
        %v374 = vld [vmem:[%s1 + $0x10] sm:$0xf]
        %v375 = vld [vmem:[%s1 + $0x14] sm:$0xf]
        %v376 = vld [vmem:[%s1 + $0x18] sm:$0xf]
        %v377 = vld [vmem:[%s1 + $0x1c] sm:$0xf]
        %v378 = vld [vmem:[%s1 + $0x20] sm:$0xf]
        %v379 = vld [vmem:[%s1 + $0x24] sm:$0xf]
        %v380 = vld [vmem:[%s1 + $0x28] sm:$0xf]
        %v381 = vld [vmem:[%s1 + $0x2c] sm:$0xf]
        %v382 = vld [vmem:[%s1 + $0x30] sm:$0xf]
        %v383 = vld [vmem:[%s1 + $0x34] sm:$0xf]
        %v384 = vld [vmem:[%s1 + $0x38] sm:$0xf]
        %v385 = vld [vmem:[%s1 + $0x3c] sm:$0xf]
        %v386 = vld [vmem:[%s1 + $0x40] sm:$0xf]
        %v387 = vld [vmem:[%s1 + $0x44] sm:$0xf]
        %v388 = vld [vmem:[%s1 + $0x48] sm:$0xf]
        %v389 = vld [vmem:[%s1 + $0x4c] sm:$0xf]
        %v390 = vld [vmem:[%s1 + $0x50] sm:$0xf]
        %v391 = vld [vmem:[%s1 + $0x54] sm:$0xf]
        %v392 = vld [vmem:[%s1 + $0x58] sm:$0xf]
        %v393 = vld [vmem:[%s1 + $0x5c] sm:$0xf]
        %v394 = vld [vmem:[%s1 + $0x60] sm:$0xf]
        %v395 = vld [vmem:[%s1 + $0x64] sm:$0xf]
        %v396 = vld [vmem:[%s1 + $0x68] sm:$0xf]
        %v397 = vld [vmem:[%s1 + $0x6c] sm:$0xf]
        %v398 = vld [vmem:[%s1 + $0x70] sm:$0xf]
        %v399 = vld [vmem:[%s1 + $0x74] sm:$0xf]
        %v400 = vld [vmem:[%s1 + $0x78] sm:$0xf]
        %v401 = vld [vmem:[%s1 + $0x7c] sm:$0xf]
        %v402 = vld [vmem:[%s1 + $0x80] sm:$0xf]
        %v403 = vld [vmem:[%s1 + $0x84] sm:$0xf]
        %v404 = vld [vmem:[%s1 + $0x88] sm:$0xf]
        %v405 = vld [vmem:[%s1 + $0x8c] sm:$0xf]
        %v406 = vld [vmem:[%s1 + $0x90] sm:$0xf]
        %v407 = vld [vmem:[%s1 + $0x94] sm:$0xf]
        %v408 = vld [vmem:[%s1 + $0x98] sm:$0xf]
        %v409 = vld [vmem:[%s1 + $0x9c] sm:$0xf]
        %v410 = vld [vmem:[%s1 + $0xa0] sm:$0xf]
        %v411 = vld [vmem:[%s1 + $0xa4] sm:$0xf]
        %v412 = vld [vmem:[%s1 + $0xa8] sm:$0xf]
        %v413 = vld [vmem:[%s1 + $0xac] sm:$0xf]
        %v414 = vld [vmem:[%s1 + $0xb0] sm:$0xf]
        %v415 = vld [vmem:[%s1 + $0xb4] sm:$0xf]
        %v416 = vld [vmem:[%s1 + $0xb8] sm:$0xf]
        %v417 = vld [vmem:[%s1 + $0xbc] sm:$0xf]
        %v418 = vld [vmem:[%s1 + $0xc0] sm:$0xf]
        %v419 = vld [vmem:[%s1 + $0xc4] sm:$0xf]
        %v420 = vld [vmem:[%s1 + $0xc8] sm:$0xf]
        %v421 = vld [vmem:[%s1 + $0xcc] sm:$0xf]
        %v422 = vld [vmem:[%s1 + $0xd0] sm:$0xf]
        %v423 = vld [vmem:[%s1 + $0xd4] sm:$0xf]
        %v424 = vld [vmem:[%s1 + $0xd8] sm:$0xf]
        %v425 = vld [vmem:[%s1 + $0xdc] sm:$0xf]
        %v426 = vld [vmem:[%s1 + $0xe0] sm:$0xf]
        %v427 = vld [vmem:[%s1 + $0xe4] sm:$0xf]
        %v428 = vld [vmem:[%s1 + $0xe8] sm:$0xf]
        %v429 = vld [vmem:[%s1 + $0xec] sm:$0xf]
        %v430 = vld [vmem:[%s1 + $0xf0] sm:$0xf]
        %v431 = vld [vmem:[%s1 + $0xf4] sm:$0xf]
        %v432 = vld [vmem:[%s1 + $0xf8] sm:$0xf]
        %v433 = vld [vmem:[%s1 + $0xfc] sm:$0xf]
        %v434 = vld [vmem:[%s2] sm:$0x1]
        %v436 = vlaneseq
        %v437 = vshrl.u32 %v436, 7
        %v438 = vsub.s32 0, %v437
        %v439 = vrot.slane %v434, %v438
        %v473 = vunpack.c.l.b16 %v338
        %v474 = vunpack.c.h.b16 %v338
        %v475 = vunpack.c.l.b16 %v339
        %v476 = vunpack.c.h.b16 %v339
        %v477 = vunpack.c.l.b16 %v340
        %v478 = vunpack.c.h.b16 %v340
        %v479 = vunpack.c.l.b16 %v341
        %v480 = vunpack.c.h.b16 %v341
        %v481 = vunpack.c.l.b16 %v342
        %v482 = vunpack.c.h.b16 %v342
        %v483 = vunpack.c.l.b16 %v343
        %v484 = vunpack.c.h.b16 %v343
        %v485 = vunpack.c.l.b16 %v344
        %v486 = vunpack.c.h.b16 %v344
        %v487 = vunpack.c.l.b16 %v345
        %v488 = vunpack.c.h.b16 %v345
        %v489 = vunpack.c.l.b16 %v346
        %v490 = vunpack.c.h.b16 %v346
        %v491 = vunpack.c.l.b16 %v347
        %v492 = vunpack.c.h.b16 %v347
        %v493 = vunpack.c.l.b16 %v348
        %v494 = vunpack.c.h.b16 %v348
        %v495 = vunpack.c.l.b16 %v349
        %v496 = vunpack.c.h.b16 %v349
        %v497 = vunpack.c.l.b16 %v350
        %v498 = vunpack.c.h.b16 %v350
        %v499 = vunpack.c.l.b16 %v351
        %v500 = vunpack.c.h.b16 %v351
        %v501 = vunpack.c.l.b16 %v352
        %v502 = vunpack.c.h.b16 %v352
        %v503 = vunpack.c.l.b16 %v353
        %v504 = vunpack.c.h.b16 %v353
        %v505 = vunpack.c.l.b16 %v354
        %v506 = vunpack.c.h.b16 %v354
        %v507 = vunpack.c.l.b16 %v355
        %v508 = vunpack.c.h.b16 %v355
        %v509 = vunpack.c.l.b16 %v356
        %v510 = vunpack.c.h.b16 %v356
        %v511 = vunpack.c.l.b16 %v357
        %v512 = vunpack.c.h.b16 %v357
        %v513 = vunpack.c.l.b16 %v358
        %v514 = vunpack.c.h.b16 %v358
        %v515 = vunpack.c.l.b16 %v359
        %v516 = vunpack.c.h.b16 %v359
        %v517 = vunpack.c.l.b16 %v360
        %v518 = vunpack.c.h.b16 %v360
        %v519 = vunpack.c.l.b16 %v361
        %v520 = vunpack.c.h.b16 %v361
        %v521 = vunpack.c.l.b16 %v362
        %v522 = vunpack.c.h.b16 %v362
        %v523 = vunpack.c.l.b16 %v363
        %v524 = vunpack.c.h.b16 %v363
        %v525 = vunpack.c.l.b16 %v364
        %v526 = vunpack.c.h.b16 %v364
        %v527 = vunpack.c.l.b16 %v365
        %v528 = vunpack.c.h.b16 %v365
        %v529 = vunpack.c.l.b16 %v366
        %v530 = vunpack.c.h.b16 %v366
        %v531 = vunpack.c.l.b16 %v367
        %v532 = vunpack.c.h.b16 %v367
        %v533 = vunpack.c.l.b16 %v368
        %v534 = vunpack.c.h.b16 %v368
        %v535 = vunpack.c.l.b16 %v369
        %v536 = vunpack.c.h.b16 %v369
        %v537 = vpack.c.b16 %v477, %v473
        %v538 = vpack.c.b16 %v478, %v474
        %v539 = vpack.c.b16 %v479, %v475
        %v540 = vpack.c.b16 %v480, %v476
        %v541 = vpack.c.b16 %v485, %v481
        %v542 = vpack.c.b16 %v486, %v482
        %v543 = vpack.c.b16 %v487, %v483
        %v544 = vpack.c.b16 %v488, %v484
        %v545 = vpack.c.b16 %v493, %v489
        %v546 = vpack.c.b16 %v494, %v490
        %v547 = vpack.c.b16 %v495, %v491
        %v548 = vpack.c.b16 %v496, %v492
        %v549 = vpack.c.b16 %v501, %v497
        %v550 = vpack.c.b16 %v502, %v498
        %v551 = vpack.c.b16 %v503, %v499
        %v552 = vpack.c.b16 %v504, %v500
        %v553 = vpack.c.b16 %v509, %v505
        %v554 = vpack.c.b16 %v510, %v506
        %v555 = vpack.c.b16 %v511, %v507
        %v556 = vpack.c.b16 %v512, %v508
        %v557 = vpack.c.b16 %v517, %v513
        %v558 = vpack.c.b16 %v518, %v514
        %v559 = vpack.c.b16 %v519, %v515
        %v560 = vpack.c.b16 %v520, %v516
        %v561 = vpack.c.b16 %v525, %v521
        %v562 = vpack.c.b16 %v526, %v522
        %v563 = vpack.c.b16 %v527, %v523
        %v564 = vpack.c.b16 %v528, %v524
        %v565 = vpack.c.b16 %v533, %v529
        %v566 = vpack.c.b16 %v534, %v530
        %v567 = vpack.c.b16 %v535, %v531
        %v568 = vpack.c.b16 %v536, %v532
        %v665 = vunpack.c.l.b16 %v370
        %v666 = vunpack.c.l.b16 %v371
        %v667 = vunpack.c.l.b16 %v372
        %v668 = vunpack.c.l.b16 %v373
        %v669 = vunpack.c.l.b16 %v374
        %v670 = vunpack.c.l.b16 %v375
        %v671 = vunpack.c.l.b16 %v376
        %v672 = vunpack.c.l.b16 %v377
        %v673 = vunpack.c.l.b16 %v378
        %v674 = vunpack.c.l.b16 %v379
        %v675 = vunpack.c.l.b16 %v380
        %v676 = vunpack.c.l.b16 %v381
        %v677 = vunpack.c.l.b16 %v382
        %v678 = vunpack.c.l.b16 %v383
        %v679 = vunpack.c.l.b16 %v384
        %v680 = vunpack.c.l.b16 %v385
        %v681 = vunpack.c.l.b16 %v386
        %v682 = vunpack.c.l.b16 %v387
        %v683 = vunpack.c.l.b16 %v388
        %v684 = vunpack.c.l.b16 %v389
        %v685 = vunpack.c.l.b16 %v390
        %v686 = vunpack.c.l.b16 %v391
        %v687 = vunpack.c.l.b16 %v392
        %v688 = vunpack.c.l.b16 %v393
        %v689 = vunpack.c.l.b16 %v394
        %v690 = vunpack.c.l.b16 %v395
        %v691 = vunpack.c.l.b16 %v396
        %v692 = vunpack.c.l.b16 %v397
        %v693 = vunpack.c.l.b16 %v398
        %v694 = vunpack.c.l.b16 %v399
        %v695 = vunpack.c.l.b16 %v400
        %v696 = vunpack.c.l.b16 %v401
        %v697 = vunpack.c.l.b16 %v402
        %v698 = vunpack.c.l.b16 %v403
        %v699 = vunpack.c.l.b16 %v404
        %v700 = vunpack.c.l.b16 %v405
        %v701 = vunpack.c.l.b16 %v406
        %v702 = vunpack.c.l.b16 %v407
        %v703 = vunpack.c.l.b16 %v408
        %v704 = vunpack.c.l.b16 %v409
        %v705 = vunpack.c.l.b16 %v410
        %v706 = vunpack.c.l.b16 %v411
        %v707 = vunpack.c.l.b16 %v412
        %v708 = vunpack.c.l.b16 %v413
        %v709 = vunpack.c.l.b16 %v414
        %v710 = vunpack.c.l.b16 %v415
        %v711 = vunpack.c.l.b16 %v416
        %v712 = vunpack.c.l.b16 %v417
        %v713 = vunpack.c.l.b16 %v418
        %v714 = vunpack.c.l.b16 %v419
        %v715 = vunpack.c.l.b16 %v420
        %v716 = vunpack.c.l.b16 %v421
        %v717 = vunpack.c.l.b16 %v422
        %v718 = vunpack.c.l.b16 %v423
        %v719 = vunpack.c.l.b16 %v424
        %v720 = vunpack.c.l.b16 %v425
        %v721 = vunpack.c.l.b16 %v426
        %v722 = vunpack.c.l.b16 %v427
        %v723 = vunpack.c.l.b16 %v428
        %v724 = vunpack.c.l.b16 %v429
        %v725 = vunpack.c.l.b16 %v430
        %v726 = vunpack.c.l.b16 %v431
        %v727 = vunpack.c.l.b16 %v432
        %v728 = vunpack.c.l.b16 %v433
        %v729 = vpack.c.b16 %v666, %v665
        %v730 = vpack.c.b16 %v668, %v667
        %v731 = vpack.c.b16 %v670, %v669
        %v732 = vpack.c.b16 %v672, %v671
        %v733 = vpack.c.b16 %v674, %v673
        %v734 = vpack.c.b16 %v676, %v675
        %v735 = vpack.c.b16 %v678, %v677
        %v736 = vpack.c.b16 %v680, %v679
        %v737 = vpack.c.b16 %v682, %v681
        %v738 = vpack.c.b16 %v684, %v683
        %v739 = vpack.c.b16 %v686, %v685
        %v740 = vpack.c.b16 %v688, %v687
        %v741 = vpack.c.b16 %v690, %v689
        %v742 = vpack.c.b16 %v692, %v691
        %v743 = vpack.c.b16 %v694, %v693
        %v744 = vpack.c.b16 %v696, %v695
        %v745 = vpack.c.b16 %v698, %v697
        %v746 = vpack.c.b16 %v700, %v699
        %v747 = vpack.c.b16 %v702, %v701
        %v748 = vpack.c.b16 %v704, %v703
        %v749 = vpack.c.b16 %v706, %v705
        %v750 = vpack.c.b16 %v708, %v707
        %v751 = vpack.c.b16 %v710, %v709
        %v752 = vpack.c.b16 %v712, %v711
        %v753 = vpack.c.b16 %v714, %v713
        %v754 = vpack.c.b16 %v716, %v715
        %v755 = vpack.c.b16 %v718, %v717
        %v756 = vpack.c.b16 %v720, %v719
        %v757 = vpack.c.b16 %v722, %v721
        %v758 = vpack.c.b16 %v724, %v723
        %v759 = vpack.c.b16 %v726, %v725
        %v760 = vpack.c.b16 %v728, %v727
        %793 = vmatprep.subr.bf16.mxu0 0
        %794 = vmatpush1.bf16.msra.mxu0 %v729
        %795 = vmatprep.subr.bf16.mxu0 0
        %796 = vmatpush1.bf16.msra.mxu0 %v730
        %797 = vmatprep.subr.bf16.mxu0 0
        %798 = vmatpush1.bf16.msra.mxu0 %v731
        %799 = vmatprep.subr.bf16.mxu0 0
        %800 = vmatpush1.bf16.msra.mxu0 %v732
        %801 = vmatprep.subr.bf16.mxu0 0
        %802 = vmatpush1.bf16.msra.mxu0 %v733
        %803 = vmatprep.subr.bf16.mxu0 0
        %804 = vmatpush1.bf16.msra.mxu0 %v734
        %805 = vmatprep.subr.bf16.mxu0 0
        %806 = vmatpush1.bf16.msra.mxu0 %v735
        %807 = vmatprep.subr.bf16.mxu0 0
        %808 = vmatpush1.bf16.msra.mxu0 %v736
        %809 = vmatprep.subr.bf16.mxu0 0
        %810 = vmatpush1.bf16.msra.mxu0 %v737
        %811 = vmatprep.subr.bf16.mxu0 0
        %812 = vmatpush1.bf16.msra.mxu0 %v738
        %813 = vmatprep.subr.bf16.mxu0 0
        %814 = vmatpush1.bf16.msra.mxu0 %v739
        %815 = vmatprep.subr.bf16.mxu0 0
        %816 = vmatpush1.bf16.msra.mxu0 %v740
        %817 = vmatprep.subr.bf16.mxu0 0
        %818 = vmatpush1.bf16.msra.mxu0 %v741
        %819 = vmatprep.subr.bf16.mxu0 0
        %820 = vmatpush1.bf16.msra.mxu0 %v742
        %821 = vmatprep.subr.bf16.mxu0 0
        %822 = vmatpush1.bf16.msra.mxu0 %v743
        %823 = vmatprep.subr.bf16.mxu0 0
        %824 = vmatpush1.bf16.msra.mxu0 %v744
        %825 = vmatprep.mubr.bf16.mxu0 %v538
        %826 = vmatmul.mubr.bf16.gmra.mrb[0].mxu0 %v537
        %v827 = vpop.f32.mrb[0].mxu0
        %v828 = vadd.f32 %v439, %v827
        %v829 = vpop.f32.mrb[0].mxu0
        %v830 = vpop.f32.mrb[0].mxu0
        %v831 = vadd.f32 %v439, %v830
        %v832 = vpop.f32.mrb[0].mxu0
        %833 = vmatprep.mubr.bf16.mxu0 %v542
        %834 = vmatmul.mubr.bf16.gmra.mrb[0].mxu0 %v541
        %v835 = vpop.f32.mrb[0].mxu0
        %v836 = vadd.f32 %v439, %v835
        %v837 = vpop.f32.mrb[0].mxu0
        %v838 = vpop.f32.mrb[0].mxu0
        %v839 = vadd.f32 %v439, %v838
        %v840 = vpop.f32.mrb[0].mxu0
        %841 = vmatprep.mubr.bf16.mxu0 %v546
        %842 = vmatmul.mubr.bf16.gmra.mrb[0].mxu0 %v545
        %v843 = vpop.f32.mrb[0].mxu0
        %v844 = vadd.f32 %v439, %v843
        %v845 = vpop.f32.mrb[0].mxu0
        %v846 = vpop.f32.mrb[0].mxu0
        %v847 = vadd.f32 %v439, %v846
        %v848 = vpop.f32.mrb[0].mxu0
        %849 = vmatprep.mubr.bf16.mxu0 %v550
        %850 = vmatmul.mubr.bf16.gmra.mrb[0].mxu0 %v549
        %v851 = vpop.f32.mrb[0].mxu0
        %v852 = vadd.f32 %v439, %v851
        %v853 = vpop.f32.mrb[0].mxu0
        %v854 = vpop.f32.mrb[0].mxu0
        %v855 = vadd.f32 %v439, %v854
        %v856 = vpop.f32.mrb[0].mxu0
        %857 = vmatprep.mubr.bf16.mxu0 %v554
        %858 = vmatmul.mubr.bf16.gmra.mrb[0].mxu0 %v553
        %v859 = vpop.f32.mrb[0].mxu0
        %v860 = vadd.f32 %v439, %v859
        %v861 = vpop.f32.mrb[0].mxu0
        %v862 = vpop.f32.mrb[0].mxu0
        %v863 = vadd.f32 %v439, %v862
        %v864 = vpop.f32.mrb[0].mxu0
        %865 = vmatprep.mubr.bf16.mxu0 %v558
        %866 = vmatmul.mubr.bf16.gmra.mrb[0].mxu0 %v557
        %v867 = vpop.f32.mrb[0].mxu0
        %v868 = vadd.f32 %v439, %v867
        %v869 = vpop.f32.mrb[0].mxu0
        %v870 = vpop.f32.mrb[0].mxu0
        %v871 = vadd.f32 %v439, %v870
        %v872 = vpop.f32.mrb[0].mxu0
        %873 = vmatprep.mubr.bf16.mxu0 %v562
        %874 = vmatmul.mubr.bf16.gmra.mrb[0].mxu0 %v561
        %v875 = vpop.f32.mrb[0].mxu0
        %v876 = vadd.f32 %v439, %v875
        %v877 = vpop.f32.mrb[0].mxu0
        %v878 = vpop.f32.mrb[0].mxu0
        %v879 = vadd.f32 %v439, %v878
        %v880 = vpop.f32.mrb[0].mxu0
        %881 = vmatprep.mubr.bf16.mxu0 %v566
        %882 = vmatmul.mubr.bf16.gmra.mrb[0].mxu0 %v565
        %v883 = vpop.f32.mrb[0].mxu0
        %v884 = vadd.f32 %v439, %v883
        %v885 = vpop.f32.mrb[0].mxu0
        %v886 = vpop.f32.mrb[0].mxu0
        %v887 = vadd.f32 %v439, %v886
        %v888 = vpop.f32.mrb[0].mxu0
        %889 = vdwg.mxu0
        %890 = vmatprep.subr.bf16.mxu0 0
        %891 = vmatpush1.bf16.msra.mxu0 %v745
        %892 = vmatprep.subr.bf16.mxu0 0
        %893 = vmatpush1.bf16.msra.mxu0 %v746
        %894 = vmatprep.subr.bf16.mxu0 0
        %895 = vmatpush1.bf16.msra.mxu0 %v747
        %896 = vmatprep.subr.bf16.mxu0 0
        %897 = vmatpush1.bf16.msra.mxu0 %v748
        %898 = vmatprep.subr.bf16.mxu0 0
        %899 = vmatpush1.bf16.msra.mxu0 %v749
        %900 = vmatprep.subr.bf16.mxu0 0
        %901 = vmatpush1.bf16.msra.mxu0 %v750
        %902 = vmatprep.subr.bf16.mxu0 0
        %903 = vmatpush1.bf16.msra.mxu0 %v751
        %904 = vmatprep.subr.bf16.mxu0 0
        %905 = vmatpush1.bf16.msra.mxu0 %v752
        %906 = vmatprep.subr.bf16.mxu0 0
        %907 = vmatpush1.bf16.msra.mxu0 %v753
        %908 = vmatprep.subr.bf16.mxu0 0
        %909 = vmatpush1.bf16.msra.mxu0 %v754
        %910 = vmatprep.subr.bf16.mxu0 0
        %911 = vmatpush1.bf16.msra.mxu0 %v755
        %912 = vmatprep.subr.bf16.mxu0 0
        %913 = vmatpush1.bf16.msra.mxu0 %v756
        %914 = vmatprep.subr.bf16.mxu0 0
        %915 = vmatpush1.bf16.msra.mxu0 %v757
        %916 = vmatprep.subr.bf16.mxu0 0
        %917 = vmatpush1.bf16.msra.mxu0 %v758
        %918 = vmatprep.subr.bf16.mxu0 0
        %919 = vmatpush1.bf16.msra.mxu0 %v759
        %920 = vmatprep.subr.bf16.mxu0 0
        %921 = vmatpush1.bf16.msra.mxu0 %v760
        %922 = vmatprep.mubr.bf16.mxu0 %v540
        %923 = vmatmul.mubr.bf16.gmra.mrb[0].mxu0 %v539
        %v924 = vpop.f32.mrb[0].mxu0
        %v925 = vadd.f32 %v828, %v924
        %v926 = vpop.f32.mrb[0].mxu0
        %v927 = vpop.f32.mrb[0].mxu0
        %v928 = vadd.f32 %v831, %v927
        %v929 = vpop.f32.mrb[0].mxu0
        %930 = vmatprep.mubr.bf16.mxu0 %v544
        %931 = vmatmul.mubr.bf16.gmra.mrb[0].mxu0 %v543
        %v932 = vpop.f32.mrb[0].mxu0
        %v933 = vadd.f32 %v836, %v932
        %v934 = vpop.f32.mrb[0].mxu0
        %v935 = vpop.f32.mrb[0].mxu0
        %v936 = vadd.f32 %v839, %v935
        %v937 = vpop.f32.mrb[0].mxu0
        %938 = vmatprep.mubr.bf16.mxu0 %v548
        %939 = vmatmul.mubr.bf16.gmra.mrb[0].mxu0 %v547
        %v940 = vpop.f32.mrb[0].mxu0
        %v941 = vadd.f32 %v844, %v940
        %v942 = vpop.f32.mrb[0].mxu0
        %v943 = vpop.f32.mrb[0].mxu0
        %v944 = vadd.f32 %v847, %v943
        %v945 = vpop.f32.mrb[0].mxu0
        %946 = vmatprep.mubr.bf16.mxu0 %v552
        %947 = vmatmul.mubr.bf16.gmra.mrb[0].mxu0 %v551
        %v948 = vpop.f32.mrb[0].mxu0
        %v949 = vadd.f32 %v852, %v948
        %v950 = vpop.f32.mrb[0].mxu0
        %v951 = vpop.f32.mrb[0].mxu0
        %v952 = vadd.f32 %v855, %v951
        %v953 = vpop.f32.mrb[0].mxu0
        %954 = vmatprep.mubr.bf16.mxu0 %v556
        %955 = vmatmul.mubr.bf16.gmra.mrb[0].mxu0 %v555
        %v956 = vpop.f32.mrb[0].mxu0
        %v957 = vadd.f32 %v860, %v956
        %v958 = vpop.f32.mrb[0].mxu0
        %v959 = vpop.f32.mrb[0].mxu0
        %v960 = vadd.f32 %v863, %v959
        %v961 = vpop.f32.mrb[0].mxu0
        %962 = vmatprep.mubr.bf16.mxu0 %v560
        %963 = vmatmul.mubr.bf16.gmra.mrb[0].mxu0 %v559
        %v964 = vpop.f32.mrb[0].mxu0
        %v965 = vadd.f32 %v868, %v964
        %v966 = vpop.f32.mrb[0].mxu0
        %v967 = vpop.f32.mrb[0].mxu0
        %v968 = vadd.f32 %v871, %v967
        %v969 = vpop.f32.mrb[0].mxu0
        %970 = vmatprep.mubr.bf16.mxu0 %v564
        %971 = vmatmul.mubr.bf16.gmra.mrb[0].mxu0 %v563
        %v972 = vpop.f32.mrb[0].mxu0
        %v973 = vadd.f32 %v876, %v972
        %v974 = vpop.f32.mrb[0].mxu0
        %v975 = vpop.f32.mrb[0].mxu0
        %v976 = vadd.f32 %v879, %v975
        %v977 = vpop.f32.mrb[0].mxu0
        %978 = vmatprep.mubr.bf16.mxu0 %v568
        %979 = vmatmul.mubr.bf16.gmra.mrb[0].mxu0 %v567
        %v980 = vpop.f32.mrb[0].mxu0
        %v981 = vadd.f32 %v884, %v980
        %v982 = vpop.f32.mrb[0].mxu0
        %v983 = vpop.f32.mrb[0].mxu0
        %v984 = vadd.f32 %v887, %v983
        %v985 = vpop.f32.mrb[0].mxu0
        %986 = vdwg.mxu0
        %vm987 = vcmp.ge.f32.partialorder %v925, 0.0
        %vm988 = vcmp.ge.f32.partialorder %v928, 0.0
        %vm989 = vcmp.ge.f32.partialorder %v933, 0.0
        %vm990 = vcmp.ge.f32.partialorder %v936, 0.0
        %vm991 = vcmp.ge.f32.partialorder %v941, 0.0
        %vm992 = vcmp.ge.f32.partialorder %v944, 0.0
        %vm993 = vcmp.ge.f32.partialorder %v949, 0.0
        %vm994 = vcmp.ge.f32.partialorder %v952, 0.0
        %vm995 = vcmp.ge.f32.partialorder %v957, 0.0
        %vm996 = vcmp.ge.f32.partialorder %v960, 0.0
        %vm997 = vcmp.ge.f32.partialorder %v965, 0.0
        %vm998 = vcmp.ge.f32.partialorder %v968, 0.0
        %vm999 = vcmp.ge.f32.partialorder %v973, 0.0
        %vm1000 = vcmp.ge.f32.partialorder %v976, 0.0
        %vm1001 = vcmp.ge.f32.partialorder %v981, 0.0
        %vm1002 = vcmp.ge.f32.partialorder %v984, 0.0
        %v1003 = vmul.f32 %v925, 0.01
        %v1004 = vmul.f32 %v928, 0.01
        %v1005 = vmul.f32 %v933, 0.01
        %v1006 = vmul.f32 %v936, 0.01
        %v1007 = vmul.f32 %v941, 0.01
        %v1008 = vmul.f32 %v944, 0.01
        %v1009 = vmul.f32 %v949, 0.01
        %v1010 = vmul.f32 %v952, 0.01
        %v1011 = vmul.f32 %v957, 0.01
        %v1012 = vmul.f32 %v960, 0.01
        %v1013 = vmul.f32 %v965, 0.01
        %v1014 = vmul.f32 %v968, 0.01
        %v1015 = vmul.f32 %v973, 0.01
        %v1016 = vmul.f32 %v976, 0.01
        %v1017 = vmul.f32 %v981, 0.01
        %v1018 = vmul.f32 %v984, 0.01
        %v1019 = vsel %vm987, %v925, %v1003
        %v1020 = vsel %vm988, %v928, %v1004
        %v1021 = vsel %vm989, %v933, %v1005
        %v1022 = vsel %vm990, %v936, %v1006
        %v1023 = vsel %vm991, %v941, %v1007
        %v1024 = vsel %vm992, %v944, %v1008
        %v1025 = vsel %vm993, %v949, %v1009
        %v1026 = vsel %vm994, %v952, %v1010
        %v1027 = vsel %vm995, %v957, %v1011
        %v1028 = vsel %vm996, %v960, %v1012
        %v1029 = vsel %vm997, %v965, %v1013
        %v1030 = vsel %vm998, %v968, %v1014
        %v1031 = vsel %vm999, %v973, %v1015
        %v1032 = vsel %vm1000, %v976, %v1016
        %v1033 = vsel %vm1001, %v981, %v1017
        %v1034 = vsel %vm1002, %v984, %v1018
        %v1035 = vld [vmem:[%s3] sm:$0xff]
        %v1036 = vld [vmem:[%s3 + $0x8] sm:$0xff]
        %v1037 = vld [vmem:[%s3 + $0x10] sm:$0xff]
        %v1038 = vld [vmem:[%s3 + $0x18] sm:$0xff]
        %v1039 = vld [vmem:[%s3 + $0x20] sm:$0xff]
        %v1040 = vld [vmem:[%s3 + $0x28] sm:$0xff]
        %v1041 = vld [vmem:[%s3 + $0x30] sm:$0xff]
        %v1042 = vld [vmem:[%s3 + $0x38] sm:$0xff]
        %v1043 = vld [vmem:[%s4] sm:$0x1]
        %v1045 = vlaneseq
        %v1046 = vshrl.u32 %v1045, 7
        %v1047 = vsub.s32 0, %v1046
        %v1048 = vrot.slane %v1043, %v1047
        %vm1050 = vcmask 523264
        %v1052 = vsel %vm1050, %v1019, 0
        %v1055 = vsel %vm1050, %v1020, 0
        %v1058 = vsel %vm1050, %v1021, 0
        %v1061 = vsel %vm1050, %v1022, 0
        %v1064 = vsel %vm1050, %v1023, 0
        %v1067 = vsel %vm1050, %v1024, 0
        %v1070 = vsel %vm1050, %v1025, 0
        %v1073 = vsel %vm1050, %v1026, 0
        %v1076 = vsel %vm1050, %v1027, 0
        %v1079 = vsel %vm1050, %v1028, 0
        %v1082 = vsel %vm1050, %v1029, 0
        %v1085 = vsel %vm1050, %v1030, 0
        %v1088 = vsel %vm1050, %v1031, 0
        %v1091 = vsel %vm1050, %v1032, 0
        %v1094 = vsel %vm1050, %v1033, 0
        %v1097 = vsel %vm1050, %v1034, 0
        %1099 = vmatprep.subr.mxu0 0.0
        %1100 = vmatpush1.msra.mxu0 %v1035
        %1101 = vmatprep.subr.mxu0 0.0
        %1102 = vmatpush1.msra.mxu0 %v1036
        %1103 = vmatprep.subr.mxu0 0.0
        %1104 = vmatpush1.msra.mxu0 %v1037
        %1105 = vmatprep.subr.mxu0 0.0
        %1106 = vmatpush1.msra.mxu0 %v1038
        %1107 = vmatprep.subr.mxu0 0.0
        %1108 = vmatpush1.msra.mxu0 %v1039
        %1109 = vmatprep.subr.mxu0 0.0
        %1110 = vmatpush1.msra.mxu0 %v1040
        %1111 = vmatprep.subr.mxu0 0.0
        %1112 = vmatpush1.msra.mxu0 %v1041
        %1113 = vmatprep.subr.mxu0 0.0
        %1114 = vmatpush1.msra.mxu0 %v1042
        %1115 = vmatprep.subr.mxu0 0.0
        %1116 = vmatpush1.msra.mxu0 0.0
        %1117 = vmatprep.subr.mxu0 0.0
        %1118 = vmatpush1.msra.mxu0 0.0
        %1119 = vmatprep.subr.mxu0 0.0
        %1120 = vmatpush1.msra.mxu0 0.0
        %1121 = vmatprep.subr.mxu0 0.0
        %1122 = vmatpush1.msra.mxu0 0.0
        %1123 = vmatprep.subr.mxu0 0.0
        %1124 = vmatpush1.msra.mxu0 0.0
        %1125 = vmatprep.subr.mxu0 0.0
        %1126 = vmatpush1.msra.mxu0 0.0
        %1127 = vmatprep.subr.mxu0 0.0
        %1128 = vmatpush1.msra.mxu0 0.0
        %1129 = vmatprep.subr.mxu0 0.0
        %1130 = vmatpush1.msra.mxu0 0.0
        %1131 = vmatprep.subr.mxu0 0.0
        %1132 = vmatpush1.msra.mxu0 0.0
        %1133 = vmatprep.subr.mxu0 0.0
        %1134 = vmatpush1.msra.mxu0 0.0
        %1135 = vmatprep.subr.mxu0 0.0
        %1136 = vmatpush1.msra.mxu0 0.0
        %1137 = vmatprep.subr.mxu0 0.0
        %1138 = vmatpush1.msra.mxu0 0.0
        %1139 = vmatprep.subr.mxu0 0.0
        %1140 = vmatpush1.msra.mxu0 0.0
        %1141 = vmatprep.subr.mxu0 0.0
        %1142 = vmatpush1.msra.mxu0 0.0
        %1143 = vmatprep.subr.mxu0 0.0
        %1144 = vmatpush1.msra.mxu0 0.0
        %1145 = vmatprep.subr.mxu0 0.0
        %1146 = vmatpush1.msra.mxu0 0.0
        %1147 = vmatprep.subr.mxu0 0.0
        %1148 = vmatpush1.msra.mxu0 0.0
        %1149 = vmatprep.subr.mxu0 0.0
        %1150 = vmatpush1.msra.mxu0 0.0
        %1151 = vmatprep.subr.mxu0 0.0
        %1152 = vmatpush1.msra.mxu0 0.0
        %1153 = vmatprep.subr.mxu0 0.0
        %1154 = vmatpush1.msra.mxu0 0.0
        %1155 = vmatprep.subr.mxu0 0.0
        %1156 = vmatpush1.msra.mxu0 0.0
        %1157 = vmatprep.subr.mxu0 0.0
        %1158 = vmatpush1.msra.mxu0 0.0
        %1159 = vmatprep.subr.mxu0 0.0
        %1160 = vmatpush1.msra.mxu0 0.0
        %1161 = vmatprep.subr.mxu0 0.0
        %1162 = vmatpush1.msra.mxu0 0.0
        %1163 = vmatprep.mubr.f32.mxu0 0.0
        %1164 = vmatmul.mubr.f32.gmra.mrb[0].mxu0 %v1052
        %v1165 = vpop.f32.mrb[0].mxu0
        %v1166 = vadd.f32 %v1048, %v1165
        %v1167 = vpop.f32.mrb[0].mxu0
        %1168 = vmatprep.mubr.f32.mxu0 0.0
        %1169 = vmatmul.mubr.f32.gmra.mrb[0].mxu0 %v1055
        %v1170 = vpop.f32.mrb[0].mxu0
        %v1171 = vadd.f32 %v1048, %v1170
        %v1172 = vpop.f32.mrb[0].mxu0
        %1173 = vmatprep.mubr.f32.mxu0 0.0
        %1174 = vmatmul.mubr.f32.gmra.mrb[0].mxu0 %v1058
        %v1175 = vpop.f32.mrb[0].mxu0
        %v1176 = vadd.f32 %v1048, %v1175
        %v1177 = vpop.f32.mrb[0].mxu0
        %1178 = vmatprep.mubr.f32.mxu0 0.0
        %1179 = vmatmul.mubr.f32.gmra.mrb[0].mxu0 %v1061
        %v1180 = vpop.f32.mrb[0].mxu0
        %v1181 = vadd.f32 %v1048, %v1180
        %v1182 = vpop.f32.mrb[0].mxu0
        %1183 = vmatprep.mubr.f32.mxu0 0.0
        %1184 = vmatmul.mubr.f32.gmra.mrb[0].mxu0 %v1064
        %v1185 = vpop.f32.mrb[0].mxu0
        %v1186 = vadd.f32 %v1048, %v1185
        %v1187 = vpop.f32.mrb[0].mxu0
        %1188 = vmatprep.mubr.f32.mxu0 0.0
        %1189 = vmatmul.mubr.f32.gmra.mrb[0].mxu0 %v1067
        %v1190 = vpop.f32.mrb[0].mxu0
        %v1191 = vadd.f32 %v1048, %v1190
        %v1192 = vpop.f32.mrb[0].mxu0
        %1193 = vmatprep.mubr.f32.mxu0 0.0
        %1194 = vmatmul.mubr.f32.gmra.mrb[0].mxu0 %v1070
        %v1195 = vpop.f32.mrb[0].mxu0
        %v1196 = vadd.f32 %v1048, %v1195
        %v1197 = vpop.f32.mrb[0].mxu0
        %1198 = vmatprep.mubr.f32.mxu0 0.0
        %1199 = vmatmul.mubr.f32.gmra.mrb[0].mxu0 %v1073
        %v1200 = vpop.f32.mrb[0].mxu0
        %v1201 = vadd.f32 %v1048, %v1200
        %v1202 = vpop.f32.mrb[0].mxu0
        %1203 = vmatprep.mubr.f32.mxu0 0.0
        %1204 = vmatmul.mubr.f32.gmra.mrb[0].mxu0 %v1076
        %v1205 = vpop.f32.mrb[0].mxu0
        %v1206 = vadd.f32 %v1048, %v1205
        %v1207 = vpop.f32.mrb[0].mxu0
        %1208 = vmatprep.mubr.f32.mxu0 0.0
        %1209 = vmatmul.mubr.f32.gmra.mrb[0].mxu0 %v1079
        %v1210 = vpop.f32.mrb[0].mxu0
        %v1211 = vadd.f32 %v1048, %v1210
        %v1212 = vpop.f32.mrb[0].mxu0
        %1213 = vmatprep.mubr.f32.mxu0 0.0
        %1214 = vmatmul.mubr.f32.gmra.mrb[0].mxu0 %v1082
        %v1215 = vpop.f32.mrb[0].mxu0
        %v1216 = vadd.f32 %v1048, %v1215
        %v1217 = vpop.f32.mrb[0].mxu0
        %1218 = vmatprep.mubr.f32.mxu0 0.0
        %1219 = vmatmul.mubr.f32.gmra.mrb[0].mxu0 %v1085
        %v1220 = vpop.f32.mrb[0].mxu0
        %v1221 = vadd.f32 %v1048, %v1220
        %v1222 = vpop.f32.mrb[0].mxu0
        %1223 = vmatprep.mubr.f32.mxu0 0.0
        %1224 = vmatmul.mubr.f32.gmra.mrb[0].mxu0 %v1088
        %v1225 = vpop.f32.mrb[0].mxu0
        %v1226 = vadd.f32 %v1048, %v1225
        %v1227 = vpop.f32.mrb[0].mxu0
        %1228 = vmatprep.mubr.f32.mxu0 0.0
        %1229 = vmatmul.mubr.f32.gmra.mrb[0].mxu0 %v1091
        %v1230 = vpop.f32.mrb[0].mxu0
        %v1231 = vadd.f32 %v1048, %v1230
        %v1232 = vpop.f32.mrb[0].mxu0
        %1233 = vmatprep.mubr.f32.mxu0 0.0
        %1234 = vmatmul.mubr.f32.gmra.mrb[0].mxu0 %v1094
        %v1235 = vpop.f32.mrb[0].mxu0
        %v1236 = vadd.f32 %v1048, %v1235
        %v1237 = vpop.f32.mrb[0].mxu0
        %1238 = vmatprep.mubr.f32.mxu0 0.0
        %1239 = vmatmul.mubr.f32.gmra.mrb[0].mxu0 %v1097
        %v1240 = vpop.f32.mrb[0].mxu0
        %v1241 = vadd.f32 %v1048, %v1240
        %v1242 = vpop.f32.mrb[0].mxu0
        %1243 = vdwg.mxu0
        %vm1244 = vcmp.ge.f32.partialorder %v1166, 0.0
        %vm1245 = vcmp.ge.f32.partialorder %v1171, 0.0
        %vm1246 = vcmp.ge.f32.partialorder %v1176, 0.0
        %vm1247 = vcmp.ge.f32.partialorder %v1181, 0.0
        %vm1248 = vcmp.ge.f32.partialorder %v1186, 0.0
        %vm1249 = vcmp.ge.f32.partialorder %v1191, 0.0
        %vm1250 = vcmp.ge.f32.partialorder %v1196, 0.0
        %vm1251 = vcmp.ge.f32.partialorder %v1201, 0.0
        %vm1252 = vcmp.ge.f32.partialorder %v1206, 0.0
        %vm1253 = vcmp.ge.f32.partialorder %v1211, 0.0
        %vm1254 = vcmp.ge.f32.partialorder %v1216, 0.0
        %vm1255 = vcmp.ge.f32.partialorder %v1221, 0.0
        %vm1256 = vcmp.ge.f32.partialorder %v1226, 0.0
        %vm1257 = vcmp.ge.f32.partialorder %v1231, 0.0
        %vm1258 = vcmp.ge.f32.partialorder %v1236, 0.0
        %vm1259 = vcmp.ge.f32.partialorder %v1241, 0.0
        %v1260 = vmul.f32 %v1166, 0.01
        %v1261 = vmul.f32 %v1171, 0.01
        %v1262 = vmul.f32 %v1176, 0.01
        %v1263 = vmul.f32 %v1181, 0.01
        %v1264 = vmul.f32 %v1186, 0.01
        %v1265 = vmul.f32 %v1191, 0.01
        %v1266 = vmul.f32 %v1196, 0.01
        %v1267 = vmul.f32 %v1201, 0.01
        %v1268 = vmul.f32 %v1206, 0.01
        %v1269 = vmul.f32 %v1211, 0.01
        %v1270 = vmul.f32 %v1216, 0.01
        %v1271 = vmul.f32 %v1221, 0.01
        %v1272 = vmul.f32 %v1226, 0.01
        %v1273 = vmul.f32 %v1231, 0.01
        %v1274 = vmul.f32 %v1236, 0.01
        %v1275 = vmul.f32 %v1241, 0.01
        %v1276 = vsel %vm1244, %v1166, %v1260
        %v1277 = vsel %vm1245, %v1171, %v1261
        %v1278 = vsel %vm1246, %v1176, %v1262
        %v1279 = vsel %vm1247, %v1181, %v1263
        %v1280 = vsel %vm1248, %v1186, %v1264
        %v1281 = vsel %vm1249, %v1191, %v1265
        %v1282 = vsel %vm1250, %v1196, %v1266
        %v1283 = vsel %vm1251, %v1201, %v1267
        %v1284 = vsel %vm1252, %v1206, %v1268
        %v1285 = vsel %vm1253, %v1211, %v1269
        %v1286 = vsel %vm1254, %v1216, %v1270
        %v1287 = vsel %vm1255, %v1221, %v1271
        %v1288 = vsel %vm1256, %v1226, %v1272
        %v1289 = vsel %vm1257, %v1231, %v1273
        %v1290 = vsel %vm1258, %v1236, %v1274
        %v1291 = vsel %vm1259, %v1241, %v1275
        %v1292 = vld [vmem:[%s5] sm:$0xff]
        %v1293 = vld [vmem:[%s5 + $0x8] sm:$0xff]
        %v1294 = vld [vmem:[%s5 + $0x10] sm:$0xff]
        %v1295 = vld [vmem:[%s5 + $0x18] sm:$0xff]
        %v1296 = vld [vmem:[%s6] sm:$0x1]
        %v1298 = vlaneseq
        %v1299 = vshrl.u32 %v1298, 7
        %v1300 = vsub.s32 0, %v1299
        %v1301 = vrot.slane %v1296, %v1300
        %vm1303 = vcmask 261120
        %v1305 = vsel %vm1303, %v1276, 0
        %v1308 = vsel %vm1303, %v1277, 0
        %v1311 = vsel %vm1303, %v1278, 0
        %v1314 = vsel %vm1303, %v1279, 0
        %v1317 = vsel %vm1303, %v1280, 0
        %v1320 = vsel %vm1303, %v1281, 0
        %v1323 = vsel %vm1303, %v1282, 0
        %v1326 = vsel %vm1303, %v1283, 0
        %v1329 = vsel %vm1303, %v1284, 0
        %v1332 = vsel %vm1303, %v1285, 0
        %v1335 = vsel %vm1303, %v1286, 0
        %v1338 = vsel %vm1303, %v1287, 0
        %v1341 = vsel %vm1303, %v1288, 0
        %v1344 = vsel %vm1303, %v1289, 0
        %v1347 = vsel %vm1303, %v1290, 0
        %v1350 = vsel %vm1303, %v1291, 0
        %1352 = vmatprep.subr.mxu0 0.0
        %1353 = vmatpush1.msra.mxu0 %v1292
        %1354 = vmatprep.subr.mxu0 0.0
        %1355 = vmatpush1.msra.mxu0 %v1293
        %1356 = vmatprep.subr.mxu0 0.0
        %1357 = vmatpush1.msra.mxu0 %v1294
        %1358 = vmatprep.subr.mxu0 0.0
        %1359 = vmatpush1.msra.mxu0 %v1295
        %1360 = vmatprep.subr.mxu0 0.0
        %1361 = vmatpush1.msra.mxu0 0.0
        %1362 = vmatprep.subr.mxu0 0.0
        %1363 = vmatpush1.msra.mxu0 0.0
        %1364 = vmatprep.subr.mxu0 0.0
        %1365 = vmatpush1.msra.mxu0 0.0
        %1366 = vmatprep.subr.mxu0 0.0
        %1367 = vmatpush1.msra.mxu0 0.0
        %1368 = vmatprep.subr.mxu0 0.0
        %1369 = vmatpush1.msra.mxu0 0.0
        %1370 = vmatprep.subr.mxu0 0.0
        %1371 = vmatpush1.msra.mxu0 0.0
        %1372 = vmatprep.subr.mxu0 0.0
        %1373 = vmatpush1.msra.mxu0 0.0
        %1374 = vmatprep.subr.mxu0 0.0
        %1375 = vmatpush1.msra.mxu0 0.0
        %1376 = vmatprep.subr.mxu0 0.0
        %1377 = vmatpush1.msra.mxu0 0.0
        %1378 = vmatprep.subr.mxu0 0.0
        %1379 = vmatpush1.msra.mxu0 0.0
        %1380 = vmatprep.subr.mxu0 0.0
        %1381 = vmatpush1.msra.mxu0 0.0
        %1382 = vmatprep.subr.mxu0 0.0
        %1383 = vmatpush1.msra.mxu0 0.0
        %1384 = vmatprep.subr.mxu0 0.0
        %1385 = vmatpush1.msra.mxu0 0.0
        %1386 = vmatprep.subr.mxu0 0.0
        %1387 = vmatpush1.msra.mxu0 0.0
        %1388 = vmatprep.subr.mxu0 0.0
        %1389 = vmatpush1.msra.mxu0 0.0
        %1390 = vmatprep.subr.mxu0 0.0
        %1391 = vmatpush1.msra.mxu0 0.0
        %1392 = vmatprep.subr.mxu0 0.0
        %1393 = vmatpush1.msra.mxu0 0.0
        %1394 = vmatprep.subr.mxu0 0.0
        %1395 = vmatpush1.msra.mxu0 0.0
        %1396 = vmatprep.subr.mxu0 0.0
        %1397 = vmatpush1.msra.mxu0 0.0
        %1398 = vmatprep.subr.mxu0 0.0
        %1399 = vmatpush1.msra.mxu0 0.0
        %1400 = vmatprep.subr.mxu0 0.0
        %1401 = vmatpush1.msra.mxu0 0.0
        %1402 = vmatprep.subr.mxu0 0.0
        %1403 = vmatpush1.msra.mxu0 0.0
        %1404 = vmatprep.subr.mxu0 0.0
        %1405 = vmatpush1.msra.mxu0 0.0
        %1406 = vmatprep.subr.mxu0 0.0
        %1407 = vmatpush1.msra.mxu0 0.0
        %1408 = vmatprep.subr.mxu0 0.0
        %1409 = vmatpush1.msra.mxu0 0.0
        %1410 = vmatprep.subr.mxu0 0.0
        %1411 = vmatpush1.msra.mxu0 0.0
        %1412 = vmatprep.subr.mxu0 0.0
        %1413 = vmatpush1.msra.mxu0 0.0
        %1414 = vmatprep.subr.mxu0 0.0
        %1415 = vmatpush1.msra.mxu0 0.0
        %1416 = vmatprep.mubr.f32.mxu0 0.0
        %1417 = vmatmul.mubr.f32.gmra.mrb[0].mxu0 %v1305
        %v1418 = vpop.f32.mrb[0].mxu0
        %v1419 = vadd.f32 %v1301, %v1418
        %v1420 = vpop.f32.mrb[0].mxu0
        %1421 = vmatprep.mubr.f32.mxu0 0.0
        %1422 = vmatmul.mubr.f32.gmra.mrb[0].mxu0 %v1308
        %v1423 = vpop.f32.mrb[0].mxu0
        %v1424 = vadd.f32 %v1301, %v1423
        %v1425 = vpop.f32.mrb[0].mxu0
        %1426 = vmatprep.mubr.f32.mxu0 0.0
        %1427 = vmatmul.mubr.f32.gmra.mrb[0].mxu0 %v1311
        %v1428 = vpop.f32.mrb[0].mxu0
        %v1429 = vadd.f32 %v1301, %v1428
        %v1430 = vpop.f32.mrb[0].mxu0
        %1431 = vmatprep.mubr.f32.mxu0 0.0
        %1432 = vmatmul.mubr.f32.gmra.mrb[0].mxu0 %v1314
        %v1433 = vpop.f32.mrb[0].mxu0
        %v1434 = vadd.f32 %v1301, %v1433
        %v1435 = vpop.f32.mrb[0].mxu0
        %1436 = vmatprep.mubr.f32.mxu0 0.0
        %1437 = vmatmul.mubr.f32.gmra.mrb[0].mxu0 %v1317
        %v1438 = vpop.f32.mrb[0].mxu0
        %v1439 = vadd.f32 %v1301, %v1438
        %v1440 = vpop.f32.mrb[0].mxu0
        %1441 = vmatprep.mubr.f32.mxu0 0.0
        %1442 = vmatmul.mubr.f32.gmra.mrb[0].mxu0 %v1320
        %v1443 = vpop.f32.mrb[0].mxu0
        %v1444 = vadd.f32 %v1301, %v1443
        %v1445 = vpop.f32.mrb[0].mxu0
        %1446 = vmatprep.mubr.f32.mxu0 0.0
        %1447 = vmatmul.mubr.f32.gmra.mrb[0].mxu0 %v1323
        %v1448 = vpop.f32.mrb[0].mxu0
        %v1449 = vadd.f32 %v1301, %v1448
        %v1450 = vpop.f32.mrb[0].mxu0
        %1451 = vmatprep.mubr.f32.mxu0 0.0
        %1452 = vmatmul.mubr.f32.gmra.mrb[0].mxu0 %v1326
        %v1453 = vpop.f32.mrb[0].mxu0
        %v1454 = vadd.f32 %v1301, %v1453
        %v1455 = vpop.f32.mrb[0].mxu0
        %1456 = vmatprep.mubr.f32.mxu0 0.0
        %1457 = vmatmul.mubr.f32.gmra.mrb[0].mxu0 %v1329
        %v1458 = vpop.f32.mrb[0].mxu0
        %v1459 = vadd.f32 %v1301, %v1458
        %v1460 = vpop.f32.mrb[0].mxu0
        %1461 = vmatprep.mubr.f32.mxu0 0.0
        %1462 = vmatmul.mubr.f32.gmra.mrb[0].mxu0 %v1332
        %v1463 = vpop.f32.mrb[0].mxu0
        %v1464 = vadd.f32 %v1301, %v1463
        %v1465 = vpop.f32.mrb[0].mxu0
        %1466 = vmatprep.mubr.f32.mxu0 0.0
        %1467 = vmatmul.mubr.f32.gmra.mrb[0].mxu0 %v1335
        %v1468 = vpop.f32.mrb[0].mxu0
        %v1469 = vadd.f32 %v1301, %v1468
        %v1470 = vpop.f32.mrb[0].mxu0
        %1471 = vmatprep.mubr.f32.mxu0 0.0
        %1472 = vmatmul.mubr.f32.gmra.mrb[0].mxu0 %v1338
        %v1473 = vpop.f32.mrb[0].mxu0
        %v1474 = vadd.f32 %v1301, %v1473
        %v1475 = vpop.f32.mrb[0].mxu0
        %1476 = vmatprep.mubr.f32.mxu0 0.0
        %1477 = vmatmul.mubr.f32.gmra.mrb[0].mxu0 %v1341
        %v1478 = vpop.f32.mrb[0].mxu0
        %v1479 = vadd.f32 %v1301, %v1478
        %v1480 = vpop.f32.mrb[0].mxu0
        %1481 = vmatprep.mubr.f32.mxu0 0.0
        %1482 = vmatmul.mubr.f32.gmra.mrb[0].mxu0 %v1344
        %v1483 = vpop.f32.mrb[0].mxu0
        %v1484 = vadd.f32 %v1301, %v1483
        %v1485 = vpop.f32.mrb[0].mxu0
        %1486 = vmatprep.mubr.f32.mxu0 0.0
        %1487 = vmatmul.mubr.f32.gmra.mrb[0].mxu0 %v1347
        %v1488 = vpop.f32.mrb[0].mxu0
        %v1489 = vadd.f32 %v1301, %v1488
        %v1490 = vpop.f32.mrb[0].mxu0
        %1491 = vmatprep.mubr.f32.mxu0 0.0
        %1492 = vmatmul.mubr.f32.gmra.mrb[0].mxu0 %v1350
        %v1493 = vpop.f32.mrb[0].mxu0
        %v1494 = vadd.f32 %v1301, %v1493
        %v1495 = vpop.f32.mrb[0].mxu0
        %1496 = vdwg.mxu0
        %vm1497 = vcmp.ge.f32.partialorder %v1419, 0.0
        %vm1498 = vcmp.ge.f32.partialorder %v1424, 0.0
        %vm1499 = vcmp.ge.f32.partialorder %v1429, 0.0
        %vm1500 = vcmp.ge.f32.partialorder %v1434, 0.0
        %vm1501 = vcmp.ge.f32.partialorder %v1439, 0.0
        %vm1502 = vcmp.ge.f32.partialorder %v1444, 0.0
        %vm1503 = vcmp.ge.f32.partialorder %v1449, 0.0
        %vm1504 = vcmp.ge.f32.partialorder %v1454, 0.0
        %vm1505 = vcmp.ge.f32.partialorder %v1459, 0.0
        %vm1506 = vcmp.ge.f32.partialorder %v1464, 0.0
        %vm1507 = vcmp.ge.f32.partialorder %v1469, 0.0
        %vm1508 = vcmp.ge.f32.partialorder %v1474, 0.0
        %vm1509 = vcmp.ge.f32.partialorder %v1479, 0.0
        %vm1510 = vcmp.ge.f32.partialorder %v1484, 0.0
        %vm1511 = vcmp.ge.f32.partialorder %v1489, 0.0
        %vm1512 = vcmp.ge.f32.partialorder %v1494, 0.0
        %v1513 = vmul.f32 %v1419, 0.01
        %v1514 = vmul.f32 %v1424, 0.01
        %v1515 = vmul.f32 %v1429, 0.01
        %v1516 = vmul.f32 %v1434, 0.01
        %v1517 = vmul.f32 %v1439, 0.01
        %v1518 = vmul.f32 %v1444, 0.01
        %v1519 = vmul.f32 %v1449, 0.01
        %v1520 = vmul.f32 %v1454, 0.01
        %v1521 = vmul.f32 %v1459, 0.01
        %v1522 = vmul.f32 %v1464, 0.01
        %v1523 = vmul.f32 %v1469, 0.01
        %v1524 = vmul.f32 %v1474, 0.01
        %v1525 = vmul.f32 %v1479, 0.01
        %v1526 = vmul.f32 %v1484, 0.01
        %v1527 = vmul.f32 %v1489, 0.01
        %v1528 = vmul.f32 %v1494, 0.01
        %v1529 = vsel %vm1497, %v1419, %v1513
        %v1530 = vsel %vm1498, %v1424, %v1514
        %v1531 = vsel %vm1499, %v1429, %v1515
        %v1532 = vsel %vm1500, %v1434, %v1516
        %v1533 = vsel %vm1501, %v1439, %v1517
        %v1534 = vsel %vm1502, %v1444, %v1518
        %v1535 = vsel %vm1503, %v1449, %v1519
        %v1536 = vsel %vm1504, %v1454, %v1520
        %v1537 = vsel %vm1505, %v1459, %v1521
        %v1538 = vsel %vm1506, %v1464, %v1522
        %v1539 = vsel %vm1507, %v1469, %v1523
        %v1540 = vsel %vm1508, %v1474, %v1524
        %v1541 = vsel %vm1509, %v1479, %v1525
        %v1542 = vsel %vm1510, %v1484, %v1526
        %v1543 = vsel %vm1511, %v1489, %v1527
        %v1544 = vsel %vm1512, %v1494, %v1528
        %v1545 = vld [vmem:[%s7] sm:$0xff]
        %vm1546 = vcmask 130048
        %v1548 = vsel %vm1546, %v1545, 0
        %v1551 = vsel %vm1546, %v1529, 0
        %v1554 = vsel %vm1546, %v1530, 0
        %v1557 = vsel %vm1546, %v1531, 0
        %v1560 = vsel %vm1546, %v1532, 0
        %v1563 = vsel %vm1546, %v1533, 0
        %v1566 = vsel %vm1546, %v1534, 0
        %v1569 = vsel %vm1546, %v1535, 0
        %v1572 = vsel %vm1546, %v1536, 0
        %v1575 = vsel %vm1546, %v1537, 0
        %v1578 = vsel %vm1546, %v1538, 0
        %v1581 = vsel %vm1546, %v1539, 0
        %v1584 = vsel %vm1546, %v1540, 0
        %v1587 = vsel %vm1546, %v1541, 0
        %v1590 = vsel %vm1546, %v1542, 0
        %v1593 = vsel %vm1546, %v1543, 0
        %v1596 = vsel %vm1546, %v1544, 0
        %1598 = vmatprep.subr.mxu0 0.0
        %1599 = vmatpush1.xpose.msra.mxu0 %v1551
        %1600 = vmatprep.subr.mxu0 0.0
        %1601 = vmatpush1.xpose.msra.mxu0 %v1554
        %1602 = vmatprep.subr.mxu0 0.0
        %1603 = vmatpush1.xpose.msra.mxu0 %v1557
        %1604 = vmatprep.subr.mxu0 0.0
        %1605 = vmatpush1.xpose.msra.mxu0 %v1560
        %1606 = vmatprep.subr.mxu0 0.0
        %1607 = vmatpush1.xpose.msra.mxu0 %v1563
        %1608 = vmatprep.subr.mxu0 0.0
        %1609 = vmatpush1.xpose.msra.mxu0 %v1566
        %1610 = vmatprep.subr.mxu0 0.0
        %1611 = vmatpush1.xpose.msra.mxu0 %v1569
        %1612 = vmatprep.subr.mxu0 0.0
        %1613 = vmatpush1.xpose.msra.mxu0 %v1572
        %1614 = vmatprep.subr.mxu0 0.0
        %1615 = vmatpush1.xpose.msra.mxu0 %v1575
        %1616 = vmatprep.subr.mxu0 0.0
        %1617 = vmatpush1.xpose.msra.mxu0 %v1578
        %1618 = vmatprep.subr.mxu0 0.0
        %1619 = vmatpush1.xpose.msra.mxu0 %v1581
        %1620 = vmatprep.subr.mxu0 0.0
        %1621 = vmatpush1.xpose.msra.mxu0 %v1584
        %1622 = vmatprep.subr.mxu0 0.0
        %1623 = vmatpush1.xpose.msra.mxu0 %v1587
        %1624 = vmatprep.subr.mxu0 0.0
        %1625 = vmatpush1.xpose.msra.mxu0 %v1590
        %1626 = vmatprep.subr.mxu0 0.0
        %1627 = vmatpush1.xpose.msra.mxu0 %v1593
        %1628 = vmatprep.subr.mxu0 0.0
        %1629 = vmatpush1.xpose.msra.mxu0 %v1596
        %1630 = vmatprep.subr.mxu0 0.0
        %1631 = vmatpush1.xpose.msra.mxu0 0.0
        %1632 = vmatprep.subr.mxu0 0.0
        %1633 = vmatpush1.xpose.msra.mxu0 0.0
        %1634 = vmatprep.subr.mxu0 0.0
        %1635 = vmatpush1.xpose.msra.mxu0 0.0
        %1636 = vmatprep.subr.mxu0 0.0
        %1637 = vmatpush1.xpose.msra.mxu0 0.0
        %1638 = vmatprep.subr.mxu0 0.0
        %1639 = vmatpush1.xpose.msra.mxu0 0.0
        %1640 = vmatprep.subr.mxu0 0.0
        %1641 = vmatpush1.xpose.msra.mxu0 0.0
        %1642 = vmatprep.subr.mxu0 0.0
        %1643 = vmatpush1.xpose.msra.mxu0 0.0
        %1644 = vmatprep.subr.mxu0 0.0
        %1645 = vmatpush1.xpose.msra.mxu0 0.0
        %1646 = vmatprep.subr.mxu0 0.0
        %1647 = vmatpush1.xpose.msra.mxu0 0.0
        %1648 = vmatprep.subr.mxu0 0.0
        %1649 = vmatpush1.xpose.msra.mxu0 0.0
        %1650 = vmatprep.subr.mxu0 0.0
        %1651 = vmatpush1.xpose.msra.mxu0 0.0
        %1652 = vmatprep.subr.mxu0 0.0
        %1653 = vmatpush1.xpose.msra.mxu0 0.0
        %1654 = vmatprep.subr.mxu0 0.0
        %1655 = vmatpush1.xpose.msra.mxu0 0.0
        %1656 = vmatprep.subr.mxu0 0.0
        %1657 = vmatpush1.xpose.msra.mxu0 0.0
        %1658 = vmatprep.subr.mxu0 0.0
        %1659 = vmatpush1.xpose.msra.mxu0 0.0
        %1660 = vmatprep.subr.mxu0 0.0
        %1661 = vmatpush1.xpose.msra.mxu0 0.0
        %1662 = vmatprep.mubr.f32.mxu0 0.0
        %1663 = vmatmul.mubr.f32.gmra.mrb[0].mxu0 %v1548
        %v1664 = vpop.f32.mrb[0].mxu0
        %v1665 = vadd.f32 0.0, %v1664
        %v1666 = vpop.f32.mrb[0].mxu0
        %1667 = vdwg.mxu0
        %v1668 = vld [vmem:[#allocation2] sm:$0x1]
        %1670 = vset.pattern.permute.xlu0 0
        %1671 = vperm.xlu0 %1670, %v1668
        %v1672 = vpop.permute.xlu0 %1671
        %v1674 = vlaneseq
        %v1675 = vshrl.u32 %v1674, 7
        %v1676 = vsub.s32 0, %v1675
        %v1677 = vrot.slane %v1672, %v1676
        %v1678 = vadd.f32 %v1665, %v1677
        %1679 = vst [vmem:[%s329] sm:$0x1] %v1678
        %s1680 = sand.u32 %s227, 1
        %s1681 = scalar_lea.sflag [#allocation4], %s1680
        %s1682 = sand.u32 %s227, 1
        %s1683 = scalar_lea.vmem [#allocation3], %s1682
        // Predicated region
        $region57: #{tpu_custom_call.1} parent=55 // pred_check
          %p1684 = pneg %p237
        $region58: #{tpu_custom_call.1} parent=55 // pred_check_branch
          %1686 = sbr.rel (%p1684) target = $region60
        $region59: #{tpu_custom_call.1} parent=55 // pred_region
          %s1688 = ssub.s32 16, 16
          %1689 = vsyncadd %s1681, %s1688
          %s1690 = smul.addr %s25, 16
          %s1691 = scalar_lea.hbm %s9, %s1690
          %s1693 = sshll.u32 %s1683, 4
          %s1694 = int_to_ptr.vmem [resolvable:$true] %s1693
          %1696 = dma.vmem_to_hbm [thread:$0]  %s1694, 16, %s1691, %s1681
        $region60: #{tpu_custom_call.1} parent=55 // pred_fallthru
          _
      $region56: #{tpu_custom_call.1} parent=5 // pred_fallthru
        _
      %p1697 = scmp.le.s32.totalorder 2, %s20
      // Predicated region
      $region61: #{tpu_custom_call.1} parent=5 // pred_check
        %p1698 = pneg %p1697
      $region62: #{tpu_custom_call.1} parent=5 // pred_check_branch
        %1700 = sbr.rel (%p1698) target = $region64
      $region63: #{tpu_custom_call.1} parent=5 // pred_region
        %s1701 = ssub.s32 %s20, 2
        // Predicated region
        $region65: #{tpu_custom_call.1} parent=63 // pred_check
          %p1702 = pneg %p243
        $region66: #{tpu_custom_call.1} parent=63 // pred_check_branch
          %1704 = sbr.rel (%p1702) target = $region68
        $region67: #{tpu_custom_call.1} parent=63 // pred_region
          %s1705 = sand.u32 %s228, 1
          %s1706 = scalar_lea.sflag [#allocation4], %s1705
          %s1707 = sand.u32 %s228, 1
          %s1708 = scalar_lea.vmem [#allocation3], %s1707
          %1709 = dma.done %s1706, 16
        $region68: #{tpu_custom_call.1} parent=63 // pred_fallthru
          _
      $region64: #{tpu_custom_call.1} parent=5 // pred_fallthru
        _
    $region6: #{tpu_custom_call.1} parent=1 // loop_footer
      %s24 = sadd.s32 1, %s20
    $region7: #{tpu_custom_call.1} parent=1 // loop_footer_branch
      %19 = sbr.rel target = $region3
    $region8: #{tpu_custom_call.1} parent=1 // loop_exit
      _
    %1710 = vsyncpa [#allocation4], 1
    %s1711 = scalar_lea.sflag [#allocation4], 1
    %1712 = vsyncpa %s1711, 1

</llo_original>
